<compile_context>
chip_gen: v5e
topology: v5e:2x2
jax: 0.10.0
libtpu: 0.0.40
codegen_flags: <defaults>
</compile_context>

<pallas_src>
import functools

import jax
import jax.numpy as jnp
from jax.experimental import pallas as pl
from jax.experimental.pallas import tpu as pltpu


LN_EPS = 1e-5  # PyTorch nn.LayerNorm default


def _layernorm(x):
    mean = jnp.mean(x, axis=-1, keepdims=True)
    centered = x - mean
    var = jnp.mean(centered * centered, axis=-1, keepdims=True)
    return centered * jax.lax.rsqrt(var + LN_EPS)


def _emb_assembly_kernel(cls_ref, gru_ref, dem_ref, keep_ref,
                         pos_ref, par_ref, wdem_ref, out_ref,
                         *, num_sensors, seq):
    # cls_ref : (1, 1, H)       f32  [CLS] token for this batch element
    # gru_ref : (1, K, S, H)    f32  stacked GRU outputs of the 9 sensor streams
    # dem_ref : (1, S, Ddem)    f32  demographic features
    # keep_ref: (1, T, 1)       f32  full-length pt1 keep mask (1 at cls / tail)
    # pos_ref : (L, H)          f32  position-embedding table (resident, constant block)
    # par_ref : (2K+6, H)       f32  packed params, rows:
    #             [0:K] sensor gammas, [K:2K] sensor betas, [2K] pos gamma, [2K+1] pos beta,
    #             [2K+2] dem gamma, [2K+3] dem beta, [2K+4] dem linear bias, [2K+5] mask_token
    # wdem_ref: (Ddem, H)       f32  linear_dem weight (resident, constant block)
    # out_ref : (1, T, H)            assembled embedding sequence, T = 1 + (K+2)*S
    K, S = num_sensors, seq
    H = out_ref.shape[-1]

    g_pos = par_ref[2 * K:2 * K + 1, :]
    b_pos = par_ref[2 * K + 1:2 * K + 2, :]
    g_dem = par_ref[2 * K + 2:2 * K + 3, :]
    b_dem = par_ref[2 * K + 3:2 * K + 4, :]
    lin_b = par_ref[2 * K + 4:2 * K + 5, :]
    mask_tok = par_ref[2 * K + 5:2 * K + 6, :]

    # Shared LN(position embeddings): positions are arange(S) -> static slice of the table.
    ln_pos = _layernorm(pos_ref[0:S, :]) * g_pos + b_pos                  # (S, H)

    pieces = [cls_ref[0]]                                                 # (1, H)

    # 9 sensor streams: LayerNorm_k(gru_out_k) + LN_pos(pos_emb). Dropout == identity (eval).
    for k in range(K):
        x = gru_ref[0, k]                                                 # (S, H)
        pieces.append(_layernorm(x) * par_ref[k:k + 1, :]
                      + par_ref[K + k:K + k + 1, :] + ln_pos)

    # Demographic stream: LayerNorm_dem(Linear_dem(demographic)).
    z = jnp.dot(dem_ref[0], wdem_ref[...],
                preferred_element_type=jnp.float32) + lin_b               # (S, H)
    pieces.append(_layernorm(z) * g_dem + b_dem)

    # Cat-GRU branch is zeroed under training_head_type == 'pretraining'.
    pieces.append(jnp.zeros((S, H), jnp.float32))

    emb = jnp.concatenate(pieces, axis=0)                                 # (T, H)

    # use_pt1 masking: emb * keep + mask_token * (1 - keep).
    keep = keep_ref[0]                                                    # (T, 1)
    emb = emb * keep + mask_tok * (1.0 - keep)

    out_ref[0] = emb.astype(out_ref.dtype)


def assemble_mmt_embeddings(cls_token, cls_mask, gru_outs, demographic, data_mask,
                            pos_table, sensor_gamma, sensor_beta,
                            pos_gamma, pos_beta, dem_weight, dem_bias,
                            dem_gamma, dem_beta, pt1_keep_masks, mask_token,
                            *, out_dtype=jnp.float32):
    """Embedding-assembly slice of MultiSensorBase.forward (pretraining, eval mode).

    Returns (emb, mask): emb (B, T, H) with T = 1 + 11*S, mask (B, T)."""
    B, K, S, H = gru_outs.shape
    L, H2 = pos_table.shape
    Ddem = demographic.shape[-1]
    assert H == H2, "hidden size mismatch"
    assert S <= L, "seq_length must not exceed the position-embedding table length"
    T = 1 + (K + 2) * S
    assert pt1_keep_masks.shape[1] <= T - 1, "pt1_keep_masks longer than the sequence"

    f32 = jnp.float32
    # Pack every (H,)-sized parameter into one slab -> a single input DMA.
    par = jnp.concatenate([
        sensor_gamma.astype(f32), sensor_beta.astype(f32),
        pos_gamma.reshape(1, H).astype(f32), pos_beta.reshape(1, H).astype(f32),
        dem_gamma.reshape(1, H).astype(f32), dem_beta.reshape(1, H).astype(f32),
        dem_bias.reshape(1, H).astype(f32), mask_token.reshape(1, H).astype(f32),
    ], axis=0)                                                            # (2K+6, H)

    # Full-sequence pt1 keep mask: [1 | pt1_keep_masks | 1...1] (matches the module).
    keep_full = jnp.concatenate([
        jnp.ones((B, 1), f32), pt1_keep_masks.astype(f32),
        jnp.ones((B, T - 1 - pt1_keep_masks.shape[1]), f32)], axis=1).reshape(B, T, 1)

    cost = pl.CostEstimate(
        flops=B * (10 * (K + 2) * S * H + 2 * S * Ddem * H + 4 * T * H),
        transcendentals=B * (K + 2) * S,
        bytes_accessed=4 * (B * (K * S * H + S * Ddem + T + H)
                            + (L + 2 * K + 6 + Ddem) * H + B * T * H),
    )

    emb = pl.pallas_call(
        functools.partial(_emb_assembly_kernel, num_sensors=K, seq=S),
        out_shape=jax.ShapeDtypeStruct((B, T, H), out_dtype),
        grid=(B,),
        in_specs=[
            pl.BlockSpec((1, 1, H), lambda b: (b, 0, 0)),          # cls_token
            pl.BlockSpec((1, K, S, H), lambda b: (b, 0, 0, 0)),    # stacked GRU outputs
            pl.BlockSpec((1, S, Ddem), lambda b: (b, 0, 0)),       # demographic
            pl.BlockSpec((1, T, 1), lambda b: (b, 0, 0)),          # pt1 keep mask
            pl.BlockSpec((L, H), lambda b: (0, 0)),                # pos table     (resident)
            pl.BlockSpec((2 * K + 6, H), lambda b: (0, 0)),        # packed params (resident)
            pl.BlockSpec((Ddem, H), lambda b: (0, 0)),             # dem weight    (resident)
        ],
        out_specs=pl.BlockSpec((1, T, H), lambda b: (b, 0, 0)),
        compiler_params=pltpu.CompilerParams(
            dimension_semantics=("parallel",)),                    # 2-TC win on v7x
        cost_estimate=cost,
    )(cls_token.astype(f32), gru_outs.astype(f32), demographic.astype(f32),
      keep_full, pos_table.astype(f32), par, dem_weight.astype(f32))

    # Attention-mask concat is pure data movement; cat_mask zeroed under pretraining.
    mask = jnp.concatenate(
        [cls_mask.astype(f32)] + [data_mask.astype(f32)] * (K + 1)
        + [jnp.zeros_like(data_mask, dtype=f32)], axis=1)                 # (B, T)
    return emb, mask


def assemble_mmt_embeddings_ref(cls_token, cls_mask, gru_outs, demographic, data_mask,
                                pos_table, sensor_gamma, sensor_beta,
                                pos_gamma, pos_beta, dem_weight, dem_bias,
                                dem_gamma, dem_beta, pt1_keep_masks, mask_token):
    """Pure-JAX reference mirroring the PyTorch forward (eval, pretraining head)."""
    B, K, S, H = gru_outs.shape
    T = 1 + (K + 2) * S

    def ln(x, g, b):
        m = jnp.mean(x, axis=-1, keepdims=True)
        v = jnp.mean((x - m) ** 2, axis=-1, keepdims=True)
        return (x - m) * jax.lax.rsqrt(v + LN_EPS) * g + b

    ln_pos = ln(pos_table[:S], pos_gamma, pos_beta)                       # (S, H)
    embs = [cls_token]
    for k in range(K):
        embs.append(ln(gru_outs[:, k], sensor_gamma[k], sensor_beta[k]) + ln_pos)
    embs.append(ln(demographic @ dem_weight + dem_bias, dem_gamma, dem_beta))
    embs.append(jnp.zeros((B, S, H), jnp.float32))                        # cat branch zeroed
    emb = jnp.concatenate(embs, axis=1)
    keep = jnp.concatenate([jnp.ones((B, 1)), pt1_keep_masks,
                            jnp.ones((B, T - 1 - pt1_keep_masks.shape[1]))],
                           axis=1)[..., None]
    emb = emb * keep + mask_token.reshape(1, 1, H) * (1.0 - keep)
    mask = jnp.concatenate([cls_mask] + [data_mask] * (K + 1)
                           + [jnp.zeros_like(data_mask)], axis=1)
    return emb, mask


if __name__ == "__main__":
    # mmt.hidden_size=128, mmt.max_dec_length=16, 9 GRU sensor streams, demographic dim 16.
    B, K, S, H = 2, 9, 8, 128
    L, DDEM = 16, 16

    keys = jax.random.split(jax.random.PRNGKey(0), 16)

    cls_token = jax.random.normal(keys[0], (B, 1, H), jnp.float32)
    cls_mask = jnp.ones((B, 1), jnp.float32)
    # TODO(synk): stand-ins for the nn.GRU sensor-encoder outputs (recurrence not in Pallas).
    gru_outs = jax.random.normal(keys[1], (B, K, S, H), jnp.float32)
    demographic = jax.random.normal(keys[2], (B, S, DDEM), jnp.float32)
    data_mask = (jax.random.uniform(keys[3], (B, S)) > 0.2).astype(jnp.float32)
    pos_table = jax.random.normal(keys[4], (L, H), jnp.float32)
    sensor_gamma = 1.0 + 0.1 * jax.random.normal(keys[5], (K, H), jnp.float32)
    sensor_beta = 0.1 * jax.random.normal(keys[6], (K, H), jnp.float32)
    pos_gamma = 1.0 + 0.1 * jax.random.normal(keys[7], (H,), jnp.float32)
    pos_beta = 0.1 * jax.random.normal(keys[8], (H,), jnp.float32)
    dem_weight = jax.random.normal(keys[9], (DDEM, H), jnp.float32) / jnp.sqrt(DDEM)
    dem_bias = 0.1 * jax.random.normal(keys[10], (H,), jnp.float32)
    dem_gamma = 1.0 + 0.1 * jax.random.normal(keys[11], (H,), jnp.float32)
    dem_beta = 0.1 * jax.random.normal(keys[12], (H,), jnp.float32)
    pt1_keep_masks = (jax.random.uniform(keys[13], (B, 8 * S)) > 0.15).astype(jnp.float32)
    mask_token = jax.random.normal(keys[14], (H,), jnp.float32)

    args = (cls_token, cls_mask, gru_outs, demographic, data_mask,
            pos_table, sensor_gamma, sensor_beta, pos_gamma, pos_beta,
            dem_weight, dem_bias, dem_gamma, dem_beta, pt1_keep_masks, mask_token)

    emb, mask = assemble_mmt_embeddings(*args)
    emb = jax.block_until_ready(emb)

    emb_ref, mask_ref = assemble_mmt_embeddings_ref(*args)
    T = 1 + (K + 2) * S
    assert emb.shape == (B, T, H) and mask.shape == (B, T)
    assert jnp.allclose(emb, emb_ref, atol=1e-4, rtol=1e-5), "emb mismatch vs reference"
    assert jnp.allclose(mask, mask_ref), "mask mismatch vs reference"

    print("KERNEL_OK")
</pallas_src>

<mosaic_0001>
module attributes {stable_mosaic.version = 11 : i64} {
  func.func @_emb_assembly_kernel(%arg0: i32, %arg1: memref<1x1x128xf32, #tpu.memory_space<vmem>>, %arg2: memref<1x9x8x128xf32, #tpu.memory_space<vmem>>, %arg3: memref<1x8x16xf32, #tpu.memory_space<vmem>>, %arg4: memref<1x89x1xf32, #tpu.memory_space<vmem>>, %arg5: memref<16x128xf32, #tpu.memory_space<vmem>>, %arg6: memref<24x128xf32, #tpu.memory_space<vmem>>, %arg7: memref<16x128xf32, #tpu.memory_space<vmem>>, %arg8: memref<1x89x128xf32, #tpu.memory_space<vmem>>) attributes {dimension_semantics = [#tpu.dimension_semantics<parallel>], iteration_bounds = array<i64: 2>, scalar_prefetch = 0 : i64, scratch_operands = 0 : i64, tpu.core_type = #tpu.core_type<tc>, window_params = [{transform_indices = @transform_0, window_bounds = array<i64: 1, 1, 128>}, {transform_indices = @transform_1, window_bounds = array<i64: 1, 9, 8, 128>}, {transform_indices = @transform_2, window_bounds = array<i64: 1, 8, 16>}, {transform_indices = @transform_3, window_bounds = array<i64: 1, 89, 1>}, {pipeline_mode = #tpu.pipeline_mode<synchronous>, transform_indices = @transform_4, window_bounds = array<i64: 16, 128>}, {pipeline_mode = #tpu.pipeline_mode<synchronous>, transform_indices = @transform_5, window_bounds = array<i64: 24, 128>}, {pipeline_mode = #tpu.pipeline_mode<synchronous>, transform_indices = @transform_6, window_bounds = array<i64: 16, 128>}, {transform_indices = @transform_7, window_bounds = array<i64: 1, 89, 128>}]} {
    %c18 = arith.constant 18 : index
    %c0 = arith.constant 0 : index
    %0 = vector.load %arg6[%c18, %c0] : memref<24x128xf32, #tpu.memory_space<vmem>>, vector<1x128xf32>
    %c19 = arith.constant 19 : index
    %c0_0 = arith.constant 0 : index
    %1 = vector.load %arg6[%c19, %c0_0] : memref<24x128xf32, #tpu.memory_space<vmem>>, vector<1x128xf32>
    %c20 = arith.constant 20 : index
    %c0_1 = arith.constant 0 : index
    %2 = vector.load %arg6[%c20, %c0_1] : memref<24x128xf32, #tpu.memory_space<vmem>>, vector<1x128xf32>
    %c21 = arith.constant 21 : index
    %c0_2 = arith.constant 0 : index
    %3 = vector.load %arg6[%c21, %c0_2] : memref<24x128xf32, #tpu.memory_space<vmem>>, vector<1x128xf32>
    %c22 = arith.constant 22 : index
    %c0_3 = arith.constant 0 : index
    %4 = vector.load %arg6[%c22, %c0_3] : memref<24x128xf32, #tpu.memory_space<vmem>>, vector<1x128xf32>
    %c23 = arith.constant 23 : index
    %c0_4 = arith.constant 0 : index
    %5 = vector.load %arg6[%c23, %c0_4] : memref<24x128xf32, #tpu.memory_space<vmem>>, vector<1x128xf32>
    %c0_5 = arith.constant 0 : index
    %c0_6 = arith.constant 0 : index
    %6 = vector.load %arg5[%c0_5, %c0_6] : memref<16x128xf32, #tpu.memory_space<vmem>>, vector<8x128xf32>
    %cst = arith.constant dense<0.000000e+00> : vector<8xf32>
    %7 = vector.multi_reduction <add>, %6, %cst [1] : vector<8x128xf32> to vector<8xf32>
    %8 = vector.shape_cast %7 : vector<8xf32> to vector<8x1xf32>
    %cst_7 = arith.constant 1.280000e+02 : f32
    %9 = vector.broadcast %cst_7 : f32 to vector<8x1xf32>
    %10 = arith.divf %8, %9 : vector<8x1xf32>
    %11 = vector.broadcast %10 : vector<8x1xf32> to vector<8x128xf32>
    %12 = arith.subf %6, %11 : vector<8x128xf32>
    %13 = arith.mulf %12, %12 : vector<8x128xf32>
    %cst_8 = arith.constant dense<0.000000e+00> : vector<8xf32>
    %14 = vector.multi_reduction <add>, %13, %cst_8 [1] : vector<8x128xf32> to vector<8xf32>
    %15 = vector.shape_cast %14 : vector<8xf32> to vector<8x1xf32>
    %cst_9 = arith.constant 1.280000e+02 : f32
    %16 = vector.broadcast %cst_9 : f32 to vector<8x1xf32>
    %17 = arith.divf %15, %16 : vector<8x1xf32>
    %cst_10 = arith.constant 9.99999974E-6 : f32
    %18 = vector.broadcast %cst_10 : f32 to vector<8x1xf32>
    %19 = arith.addf %17, %18 : vector<8x1xf32>
    %20 = math.rsqrt %19 : vector<8x1xf32>
    %21 = vector.broadcast %20 : vector<8x1xf32> to vector<8x128xf32>
    %22 = arith.mulf %12, %21 : vector<8x128xf32>
    %23 = vector.broadcast %0 : vector<1x128xf32> to vector<8x128xf32>
    %24 = arith.mulf %22, %23 : vector<8x128xf32>
    %25 = vector.broadcast %1 : vector<1x128xf32> to vector<8x128xf32>
    %26 = arith.addf %24, %25 : vector<8x128xf32>
    %c0_11 = arith.constant 0 : index
    %c0_12 = arith.constant 0 : index
    %c0_13 = arith.constant 0 : index
    %27 = vector.load %arg1[%c0_11, %c0_12, %c0_13] : memref<1x1x128xf32, #tpu.memory_space<vmem>>, vector<1x1x128xf32>
    %28 = vector.shape_cast %27 : vector<1x1x128xf32> to vector<1x128xf32>
    %c0_14 = arith.constant 0 : index
    %c0_15 = arith.constant 0 : index
    %c0_16 = arith.constant 0 : index
    %c0_17 = arith.constant 0 : index
    %29 = vector.load %arg2[%c0_14, %c0_15, %c0_16, %c0_17] : memref<1x9x8x128xf32, #tpu.memory_space<vmem>>, vector<1x1x8x128xf32>
    %30 = vector.shape_cast %29 : vector<1x1x8x128xf32> to vector<8x128xf32>
    %cst_18 = arith.constant dense<0.000000e+00> : vector<8xf32>
    %31 = vector.multi_reduction <add>, %30, %cst_18 [1] : vector<8x128xf32> to vector<8xf32>
    %32 = vector.shape_cast %31 : vector<8xf32> to vector<8x1xf32>
    %cst_19 = arith.constant 1.280000e+02 : f32
    %33 = vector.broadcast %cst_19 : f32 to vector<8x1xf32>
    %34 = arith.divf %32, %33 : vector<8x1xf32>
    %35 = vector.broadcast %34 : vector<8x1xf32> to vector<8x128xf32>
    %36 = arith.subf %30, %35 : vector<8x128xf32>
    %37 = arith.mulf %36, %36 : vector<8x128xf32>
    %cst_20 = arith.constant dense<0.000000e+00> : vector<8xf32>
    %38 = vector.multi_reduction <add>, %37, %cst_20 [1] : vector<8x128xf32> to vector<8xf32>
    %39 = vector.shape_cast %38 : vector<8xf32> to vector<8x1xf32>
    %cst_21 = arith.constant 1.280000e+02 : f32
    %40 = vector.broadcast %cst_21 : f32 to vector<8x1xf32>
    %41 = arith.divf %39, %40 : vector<8x1xf32>
    %cst_22 = arith.constant 9.99999974E-6 : f32
    %42 = vector.broadcast %cst_22 : f32 to vector<8x1xf32>
    %43 = arith.addf %41, %42 : vector<8x1xf32>
    %44 = math.rsqrt %43 : vector<8x1xf32>
    %45 = vector.broadcast %44 : vector<8x1xf32> to vector<8x128xf32>
    %46 = arith.mulf %36, %45 : vector<8x128xf32>
    %c0_23 = arith.constant 0 : index
    %c0_24 = arith.constant 0 : index
    %47 = vector.load %arg6[%c0_23, %c0_24] : memref<24x128xf32, #tpu.memory_space<vmem>>, vector<1x128xf32>
    %48 = vector.broadcast %47 : vector<1x128xf32> to vector<8x128xf32>
    %49 = arith.mulf %46, %48 : vector<8x128xf32>
    %c9 = arith.constant 9 : index
    %c0_25 = arith.constant 0 : index
    %50 = vector.load %arg6[%c9, %c0_25] : memref<24x128xf32, #tpu.memory_space<vmem>>, vector<1x128xf32>
    %51 = vector.broadcast %50 : vector<1x128xf32> to vector<8x128xf32>
    %52 = arith.addf %49, %51 : vector<8x128xf32>
    %53 = arith.addf %52, %26 : vector<8x128xf32>
    %c0_26 = arith.constant 0 : index
    %c1 = arith.constant 1 : index
    %c0_27 = arith.constant 0 : index
    %c0_28 = arith.constant 0 : index
    %54 = vector.load %arg2[%c0_26, %c1, %c0_27, %c0_28] : memref<1x9x8x128xf32, #tpu.memory_space<vmem>>, vector<1x1x8x128xf32>
    %55 = vector.shape_cast %54 : vector<1x1x8x128xf32> to vector<8x128xf32>
    %cst_29 = arith.constant dense<0.000000e+00> : vector<8xf32>
    %56 = vector.multi_reduction <add>, %55, %cst_29 [1] : vector<8x128xf32> to vector<8xf32>
    %57 = vector.shape_cast %56 : vector<8xf32> to vector<8x1xf32>
    %cst_30 = arith.constant 1.280000e+02 : f32
    %58 = vector.broadcast %cst_30 : f32 to vector<8x1xf32>
    %59 = arith.divf %57, %58 : vector<8x1xf32>
    %60 = vector.broadcast %59 : vector<8x1xf32> to vector<8x128xf32>
    %61 = arith.subf %55, %60 : vector<8x128xf32>
    %62 = arith.mulf %61, %61 : vector<8x128xf32>
    %cst_31 = arith.constant dense<0.000000e+00> : vector<8xf32>
    %63 = vector.multi_reduction <add>, %62, %cst_31 [1] : vector<8x128xf32> to vector<8xf32>
    %64 = vector.shape_cast %63 : vector<8xf32> to vector<8x1xf32>
    %cst_32 = arith.constant 1.280000e+02 : f32
    %65 = vector.broadcast %cst_32 : f32 to vector<8x1xf32>
    %66 = arith.divf %64, %65 : vector<8x1xf32>
    %cst_33 = arith.constant 9.99999974E-6 : f32
    %67 = vector.broadcast %cst_33 : f32 to vector<8x1xf32>
    %68 = arith.addf %66, %67 : vector<8x1xf32>
    %69 = math.rsqrt %68 : vector<8x1xf32>
    %70 = vector.broadcast %69 : vector<8x1xf32> to vector<8x128xf32>
    %71 = arith.mulf %61, %70 : vector<8x128xf32>
    %c1_34 = arith.constant 1 : index
    %c0_35 = arith.constant 0 : index
    %72 = vector.load %arg6[%c1_34, %c0_35] : memref<24x128xf32, #tpu.memory_space<vmem>>, vector<1x128xf32>
    %73 = vector.broadcast %72 : vector<1x128xf32> to vector<8x128xf32>
    %74 = arith.mulf %71, %73 : vector<8x128xf32>
    %c10 = arith.constant 10 : index
    %c0_36 = arith.constant 0 : index
    %75 = vector.load %arg6[%c10, %c0_36] : memref<24x128xf32, #tpu.memory_space<vmem>>, vector<1x128xf32>
    %76 = vector.broadcast %75 : vector<1x128xf32> to vector<8x128xf32>
    %77 = arith.addf %74, %76 : vector<8x128xf32>
    %78 = arith.addf %77, %26 : vector<8x128xf32>
    %c0_37 = arith.constant 0 : index
    %c2 = arith.constant 2 : index
    %c0_38 = arith.constant 0 : index
    %c0_39 = arith.constant 0 : index
    %79 = vector.load %arg2[%c0_37, %c2, %c0_38, %c0_39] : memref<1x9x8x128xf32, #tpu.memory_space<vmem>>, vector<1x1x8x128xf32>
    %80 = vector.shape_cast %79 : vector<1x1x8x128xf32> to vector<8x128xf32>
    %cst_40 = arith.constant dense<0.000000e+00> : vector<8xf32>
    %81 = vector.multi_reduction <add>, %80, %cst_40 [1] : vector<8x128xf32> to vector<8xf32>
    %82 = vector.shape_cast %81 : vector<8xf32> to vector<8x1xf32>
    %cst_41 = arith.constant 1.280000e+02 : f32
    %83 = vector.broadcast %cst_41 : f32 to vector<8x1xf32>
    %84 = arith.divf %82, %83 : vector<8x1xf32>
    %85 = vector.broadcast %84 : vector<8x1xf32> to vector<8x128xf32>
    %86 = arith.subf %80, %85 : vector<8x128xf32>
    %87 = arith.mulf %86, %86 : vector<8x128xf32>
    %cst_42 = arith.constant dense<0.000000e+00> : vector<8xf32>
    %88 = vector.multi_reduction <add>, %87, %cst_42 [1] : vector<8x128xf32> to vector<8xf32>
    %89 = vector.shape_cast %88 : vector<8xf32> to vector<8x1xf32>
    %cst_43 = arith.constant 1.280000e+02 : f32
    %90 = vector.broadcast %cst_43 : f32 to vector<8x1xf32>
    %91 = arith.divf %89, %90 : vector<8x1xf32>
    %cst_44 = arith.constant 9.99999974E-6 : f32
    %92 = vector.broadcast %cst_44 : f32 to vector<8x1xf32>
    %93 = arith.addf %91, %92 : vector<8x1xf32>
    %94 = math.rsqrt %93 : vector<8x1xf32>
    %95 = vector.broadcast %94 : vector<8x1xf32> to vector<8x128xf32>
    %96 = arith.mulf %86, %95 : vector<8x128xf32>
    %c2_45 = arith.constant 2 : index
    %c0_46 = arith.constant 0 : index
    %97 = vector.load %arg6[%c2_45, %c0_46] : memref<24x128xf32, #tpu.memory_space<vmem>>, vector<1x128xf32>
    %98 = vector.broadcast %97 : vector<1x128xf32> to vector<8x128xf32>
    %99 = arith.mulf %96, %98 : vector<8x128xf32>
    %c11 = arith.constant 11 : index
    %c0_47 = arith.constant 0 : index
    %100 = vector.load %arg6[%c11, %c0_47] : memref<24x128xf32, #tpu.memory_space<vmem>>, vector<1x128xf32>
    %101 = vector.broadcast %100 : vector<1x128xf32> to vector<8x128xf32>
    %102 = arith.addf %99, %101 : vector<8x128xf32>
    %103 = arith.addf %102, %26 : vector<8x128xf32>
    %c0_48 = arith.constant 0 : index
    %c3 = arith.constant 3 : index
    %c0_49 = arith.constant 0 : index
    %c0_50 = arith.constant 0 : index
    %104 = vector.load %arg2[%c0_48, %c3, %c0_49, %c0_50] : memref<1x9x8x128xf32, #tpu.memory_space<vmem>>, vector<1x1x8x128xf32>
    %105 = vector.shape_cast %104 : vector<1x1x8x128xf32> to vector<8x128xf32>
    %cst_51 = arith.constant dense<0.000000e+00> : vector<8xf32>
    %106 = vector.multi_reduction <add>, %105, %cst_51 [1] : vector<8x128xf32> to vector<8xf32>
    %107 = vector.shape_cast %106 : vector<8xf32> to vector<8x1xf32>
    %cst_52 = arith.constant 1.280000e+02 : f32
    %108 = vector.broadcast %cst_52 : f32 to vector<8x1xf32>
    %109 = arith.divf %107, %108 : vector<8x1xf32>
    %110 = vector.broadcast %109 : vector<8x1xf32> to vector<8x128xf32>
    %111 = arith.subf %105, %110 : vector<8x128xf32>
    %112 = arith.mulf %111, %111 : vector<8x128xf32>
    %cst_53 = arith.constant dense<0.000000e+00> : vector<8xf32>
    %113 = vector.multi_reduction <add>, %112, %cst_53 [1] : vector<8x128xf32> to vector<8xf32>
    %114 = vector.shape_cast %113 : vector<8xf32> to vector<8x1xf32>
    %cst_54 = arith.constant 1.280000e+02 : f32
    %115 = vector.broadcast %cst_54 : f32 to vector<8x1xf32>
    %116 = arith.divf %114, %115 : vector<8x1xf32>
    %cst_55 = arith.constant 9.99999974E-6 : f32
    %117 = vector.broadcast %cst_55 : f32 to vector<8x1xf32>
    %118 = arith.addf %116, %117 : vector<8x1xf32>
    %119 = math.rsqrt %118 : vector<8x1xf32>
    %120 = vector.broadcast %119 : vector<8x1xf32> to vector<8x128xf32>
    %121 = arith.mulf %111, %120 : vector<8x128xf32>
    %c3_56 = arith.constant 3 : index
    %c0_57 = arith.constant 0 : index
    %122 = vector.load %arg6[%c3_56, %c0_57] : memref<24x128xf32, #tpu.memory_space<vmem>>, vector<1x128xf32>
    %123 = vector.broadcast %122 : vector<1x128xf32> to vector<8x128xf32>
    %124 = arith.mulf %121, %123 : vector<8x128xf32>
    %c12 = arith.constant 12 : index
    %c0_58 = arith.constant 0 : index
    %125 = vector.load %arg6[%c12, %c0_58] : memref<24x128xf32, #tpu.memory_space<vmem>>, vector<1x128xf32>
    %126 = vector.broadcast %125 : vector<1x128xf32> to vector<8x128xf32>
    %127 = arith.addf %124, %126 : vector<8x128xf32>
    %128 = arith.addf %127, %26 : vector<8x128xf32>
    %c0_59 = arith.constant 0 : index
    %c4 = arith.constant 4 : index
    %c0_60 = arith.constant 0 : index
    %c0_61 = arith.constant 0 : index
    %129 = vector.load %arg2[%c0_59, %c4, %c0_60, %c0_61] : memref<1x9x8x128xf32, #tpu.memory_space<vmem>>, vector<1x1x8x128xf32>
    %130 = vector.shape_cast %129 : vector<1x1x8x128xf32> to vector<8x128xf32>
    %cst_62 = arith.constant dense<0.000000e+00> : vector<8xf32>
    %131 = vector.multi_reduction <add>, %130, %cst_62 [1] : vector<8x128xf32> to vector<8xf32>
    %132 = vector.shape_cast %131 : vector<8xf32> to vector<8x1xf32>
    %cst_63 = arith.constant 1.280000e+02 : f32
    %133 = vector.broadcast %cst_63 : f32 to vector<8x1xf32>
    %134 = arith.divf %132, %133 : vector<8x1xf32>
    %135 = vector.broadcast %134 : vector<8x1xf32> to vector<8x128xf32>
    %136 = arith.subf %130, %135 : vector<8x128xf32>
    %137 = arith.mulf %136, %136 : vector<8x128xf32>
    %cst_64 = arith.constant dense<0.000000e+00> : vector<8xf32>
    %138 = vector.multi_reduction <add>, %137, %cst_64 [1] : vector<8x128xf32> to vector<8xf32>
    %139 = vector.shape_cast %138 : vector<8xf32> to vector<8x1xf32>
    %cst_65 = arith.constant 1.280000e+02 : f32
    %140 = vector.broadcast %cst_65 : f32 to vector<8x1xf32>
    %141 = arith.divf %139, %140 : vector<8x1xf32>
    %cst_66 = arith.constant 9.99999974E-6 : f32
    %142 = vector.broadcast %cst_66 : f32 to vector<8x1xf32>
    %143 = arith.addf %141, %142 : vector<8x1xf32>
    %144 = math.rsqrt %143 : vector<8x1xf32>
    %145 = vector.broadcast %144 : vector<8x1xf32> to vector<8x128xf32>
    %146 = arith.mulf %136, %145 : vector<8x128xf32>
    %c4_67 = arith.constant 4 : index
    %c0_68 = arith.constant 0 : index
    %147 = vector.load %arg6[%c4_67, %c0_68] : memref<24x128xf32, #tpu.memory_space<vmem>>, vector<1x128xf32>
    %148 = vector.broadcast %147 : vector<1x128xf32> to vector<8x128xf32>
    %149 = arith.mulf %146, %148 : vector<8x128xf32>
    %c13 = arith.constant 13 : index
    %c0_69 = arith.constant 0 : index
    %150 = vector.load %arg6[%c13, %c0_69] : memref<24x128xf32, #tpu.memory_space<vmem>>, vector<1x128xf32>
    %151 = vector.broadcast %150 : vector<1x128xf32> to vector<8x128xf32>
    %152 = arith.addf %149, %151 : vector<8x128xf32>
    %153 = arith.addf %152, %26 : vector<8x128xf32>
    %c0_70 = arith.constant 0 : index
    %c5 = arith.constant 5 : index
    %c0_71 = arith.constant 0 : index
    %c0_72 = arith.constant 0 : index
    %154 = vector.load %arg2[%c0_70, %c5, %c0_71, %c0_72] : memref<1x9x8x128xf32, #tpu.memory_space<vmem>>, vector<1x1x8x128xf32>
    %155 = vector.shape_cast %154 : vector<1x1x8x128xf32> to vector<8x128xf32>
    %cst_73 = arith.constant dense<0.000000e+00> : vector<8xf32>
    %156 = vector.multi_reduction <add>, %155, %cst_73 [1] : vector<8x128xf32> to vector<8xf32>
    %157 = vector.shape_cast %156 : vector<8xf32> to vector<8x1xf32>
    %cst_74 = arith.constant 1.280000e+02 : f32
    %158 = vector.broadcast %cst_74 : f32 to vector<8x1xf32>
    %159 = arith.divf %157, %158 : vector<8x1xf32>
    %160 = vector.broadcast %159 : vector<8x1xf32> to vector<8x128xf32>
    %161 = arith.subf %155, %160 : vector<8x128xf32>
    %162 = arith.mulf %161, %161 : vector<8x128xf32>
    %cst_75 = arith.constant dense<0.000000e+00> : vector<8xf32>
    %163 = vector.multi_reduction <add>, %162, %cst_75 [1] : vector<8x128xf32> to vector<8xf32>
    %164 = vector.shape_cast %163 : vector<8xf32> to vector<8x1xf32>
    %cst_76 = arith.constant 1.280000e+02 : f32
    %165 = vector.broadcast %cst_76 : f32 to vector<8x1xf32>
    %166 = arith.divf %164, %165 : vector<8x1xf32>
    %cst_77 = arith.constant 9.99999974E-6 : f32
    %167 = vector.broadcast %cst_77 : f32 to vector<8x1xf32>
    %168 = arith.addf %166, %167 : vector<8x1xf32>
    %169 = math.rsqrt %168 : vector<8x1xf32>
    %170 = vector.broadcast %169 : vector<8x1xf32> to vector<8x128xf32>
    %171 = arith.mulf %161, %170 : vector<8x128xf32>
    %c5_78 = arith.constant 5 : index
    %c0_79 = arith.constant 0 : index
    %172 = vector.load %arg6[%c5_78, %c0_79] : memref<24x128xf32, #tpu.memory_space<vmem>>, vector<1x128xf32>
    %173 = vector.broadcast %172 : vector<1x128xf32> to vector<8x128xf32>
    %174 = arith.mulf %171, %173 : vector<8x128xf32>
    %c14 = arith.constant 14 : index
    %c0_80 = arith.constant 0 : index
    %175 = vector.load %arg6[%c14, %c0_80] : memref<24x128xf32, #tpu.memory_space<vmem>>, vector<1x128xf32>
    %176 = vector.broadcast %175 : vector<1x128xf32> to vector<8x128xf32>
    %177 = arith.addf %174, %176 : vector<8x128xf32>
    %178 = arith.addf %177, %26 : vector<8x128xf32>
    %c0_81 = arith.constant 0 : index
    %c6 = arith.constant 6 : index
    %c0_82 = arith.constant 0 : index
    %c0_83 = arith.constant 0 : index
    %179 = vector.load %arg2[%c0_81, %c6, %c0_82, %c0_83] : memref<1x9x8x128xf32, #tpu.memory_space<vmem>>, vector<1x1x8x128xf32>
    %180 = vector.shape_cast %179 : vector<1x1x8x128xf32> to vector<8x128xf32>
    %cst_84 = arith.constant dense<0.000000e+00> : vector<8xf32>
    %181 = vector.multi_reduction <add>, %180, %cst_84 [1] : vector<8x128xf32> to vector<8xf32>
    %182 = vector.shape_cast %181 : vector<8xf32> to vector<8x1xf32>
    %cst_85 = arith.constant 1.280000e+02 : f32
    %183 = vector.broadcast %cst_85 : f32 to vector<8x1xf32>
    %184 = arith.divf %182, %183 : vector<8x1xf32>
    %185 = vector.broadcast %184 : vector<8x1xf32> to vector<8x128xf32>
    %186 = arith.subf %180, %185 : vector<8x128xf32>
    %187 = arith.mulf %186, %186 : vector<8x128xf32>
    %cst_86 = arith.constant dense<0.000000e+00> : vector<8xf32>
    %188 = vector.multi_reduction <add>, %187, %cst_86 [1] : vector<8x128xf32> to vector<8xf32>
    %189 = vector.shape_cast %188 : vector<8xf32> to vector<8x1xf32>
    %cst_87 = arith.constant 1.280000e+02 : f32
    %190 = vector.broadcast %cst_87 : f32 to vector<8x1xf32>
    %191 = arith.divf %189, %190 : vector<8x1xf32>
    %cst_88 = arith.constant 9.99999974E-6 : f32
    %192 = vector.broadcast %cst_88 : f32 to vector<8x1xf32>
    %193 = arith.addf %191, %192 : vector<8x1xf32>
    %194 = math.rsqrt %193 : vector<8x1xf32>
    %195 = vector.broadcast %194 : vector<8x1xf32> to vector<8x128xf32>
    %196 = arith.mulf %186, %195 : vector<8x128xf32>
    %c6_89 = arith.constant 6 : index
    %c0_90 = arith.constant 0 : index
    %197 = vector.load %arg6[%c6_89, %c0_90] : memref<24x128xf32, #tpu.memory_space<vmem>>, vector<1x128xf32>
    %198 = vector.broadcast %197 : vector<1x128xf32> to vector<8x128xf32>
    %199 = arith.mulf %196, %198 : vector<8x128xf32>
    %c15 = arith.constant 15 : index
    %c0_91 = arith.constant 0 : index
    %200 = vector.load %arg6[%c15, %c0_91] : memref<24x128xf32, #tpu.memory_space<vmem>>, vector<1x128xf32>
    %201 = vector.broadcast %200 : vector<1x128xf32> to vector<8x128xf32>
    %202 = arith.addf %199, %201 : vector<8x128xf32>
    %203 = arith.addf %202, %26 : vector<8x128xf32>
    %c0_92 = arith.constant 0 : index
    %c7 = arith.constant 7 : index
    %c0_93 = arith.constant 0 : index
    %c0_94 = arith.constant 0 : index
    %204 = vector.load %arg2[%c0_92, %c7, %c0_93, %c0_94] : memref<1x9x8x128xf32, #tpu.memory_space<vmem>>, vector<1x1x8x128xf32>
    %205 = vector.shape_cast %204 : vector<1x1x8x128xf32> to vector<8x128xf32>
    %cst_95 = arith.constant dense<0.000000e+00> : vector<8xf32>
    %206 = vector.multi_reduction <add>, %205, %cst_95 [1] : vector<8x128xf32> to vector<8xf32>
    %207 = vector.shape_cast %206 : vector<8xf32> to vector<8x1xf32>
    %cst_96 = arith.constant 1.280000e+02 : f32
    %208 = vector.broadcast %cst_96 : f32 to vector<8x1xf32>
    %209 = arith.divf %207, %208 : vector<8x1xf32>
    %210 = vector.broadcast %209 : vector<8x1xf32> to vector<8x128xf32>
    %211 = arith.subf %205, %210 : vector<8x128xf32>
    %212 = arith.mulf %211, %211 : vector<8x128xf32>
    %cst_97 = arith.constant dense<0.000000e+00> : vector<8xf32>
    %213 = vector.multi_reduction <add>, %212, %cst_97 [1] : vector<8x128xf32> to vector<8xf32>
    %214 = vector.shape_cast %213 : vector<8xf32> to vector<8x1xf32>
    %cst_98 = arith.constant 1.280000e+02 : f32
    %215 = vector.broadcast %cst_98 : f32 to vector<8x1xf32>
    %216 = arith.divf %214, %215 : vector<8x1xf32>
    %cst_99 = arith.constant 9.99999974E-6 : f32
    %217 = vector.broadcast %cst_99 : f32 to vector<8x1xf32>
    %218 = arith.addf %216, %217 : vector<8x1xf32>
    %219 = math.rsqrt %218 : vector<8x1xf32>
    %220 = vector.broadcast %219 : vector<8x1xf32> to vector<8x128xf32>
    %221 = arith.mulf %211, %220 : vector<8x128xf32>
    %c7_100 = arith.constant 7 : index
    %c0_101 = arith.constant 0 : index
    %222 = vector.load %arg6[%c7_100, %c0_101] : memref<24x128xf32, #tpu.memory_space<vmem>>, vector<1x128xf32>
    %223 = vector.broadcast %222 : vector<1x128xf32> to vector<8x128xf32>
    %224 = arith.mulf %221, %223 : vector<8x128xf32>
    %c16 = arith.constant 16 : index
    %c0_102 = arith.constant 0 : index
    %225 = vector.load %arg6[%c16, %c0_102] : memref<24x128xf32, #tpu.memory_space<vmem>>, vector<1x128xf32>
    %226 = vector.broadcast %225 : vector<1x128xf32> to vector<8x128xf32>
    %227 = arith.addf %224, %226 : vector<8x128xf32>
    %228 = arith.addf %227, %26 : vector<8x128xf32>
    %c0_103 = arith.constant 0 : index
    %c8 = arith.constant 8 : index
    %c0_104 = arith.constant 0 : index
    %c0_105 = arith.constant 0 : index
    %229 = vector.load %arg2[%c0_103, %c8, %c0_104, %c0_105] : memref<1x9x8x128xf32, #tpu.memory_space<vmem>>, vector<1x1x8x128xf32>
    %230 = vector.shape_cast %229 : vector<1x1x8x128xf32> to vector<8x128xf32>
    %cst_106 = arith.constant dense<0.000000e+00> : vector<8xf32>
    %231 = vector.multi_reduction <add>, %230, %cst_106 [1] : vector<8x128xf32> to vector<8xf32>
    %232 = vector.shape_cast %231 : vector<8xf32> to vector<8x1xf32>
    %cst_107 = arith.constant 1.280000e+02 : f32
    %233 = vector.broadcast %cst_107 : f32 to vector<8x1xf32>
    %234 = arith.divf %232, %233 : vector<8x1xf32>
    %235 = vector.broadcast %234 : vector<8x1xf32> to vector<8x128xf32>
    %236 = arith.subf %230, %235 : vector<8x128xf32>
    %237 = arith.mulf %236, %236 : vector<8x128xf32>
    %cst_108 = arith.constant dense<0.000000e+00> : vector<8xf32>
    %238 = vector.multi_reduction <add>, %237, %cst_108 [1] : vector<8x128xf32> to vector<8xf32>
    %239 = vector.shape_cast %238 : vector<8xf32> to vector<8x1xf32>
    %cst_109 = arith.constant 1.280000e+02 : f32
    %240 = vector.broadcast %cst_109 : f32 to vector<8x1xf32>
    %241 = arith.divf %239, %240 : vector<8x1xf32>
    %cst_110 = arith.constant 9.99999974E-6 : f32
    %242 = vector.broadcast %cst_110 : f32 to vector<8x1xf32>
    %243 = arith.addf %241, %242 : vector<8x1xf32>
    %244 = math.rsqrt %243 : vector<8x1xf32>
    %245 = vector.broadcast %244 : vector<8x1xf32> to vector<8x128xf32>
    %246 = arith.mulf %236, %245 : vector<8x128xf32>
    %c8_111 = arith.constant 8 : index
    %c0_112 = arith.constant 0 : index
    %247 = vector.load %arg6[%c8_111, %c0_112] : memref<24x128xf32, #tpu.memory_space<vmem>>, vector<1x128xf32>
    %248 = vector.broadcast %247 : vector<1x128xf32> to vector<8x128xf32>
    %249 = arith.mulf %246, %248 : vector<8x128xf32>
    %c17 = arith.constant 17 : index
    %c0_113 = arith.constant 0 : index
    %250 = vector.load %arg6[%c17, %c0_113] : memref<24x128xf32, #tpu.memory_space<vmem>>, vector<1x128xf32>
    %251 = vector.broadcast %250 : vector<1x128xf32> to vector<8x128xf32>
    %252 = arith.addf %249, %251 : vector<8x128xf32>
    %253 = arith.addf %252, %26 : vector<8x128xf32>
    %c0_114 = arith.constant 0 : index
    %c0_115 = arith.constant 0 : index
    %c0_116 = arith.constant 0 : index
    %254 = vector.load %arg3[%c0_114, %c0_115, %c0_116] : memref<1x8x16xf32, #tpu.memory_space<vmem>>, vector<1x8x16xf32>
    %255 = vector.shape_cast %254 : vector<1x8x16xf32> to vector<8x16xf32>
    %c0_117 = arith.constant 0 : index
    %c0_118 = arith.constant 0 : index
    %256 = vector.load %arg7[%c0_117, %c0_118] : memref<16x128xf32, #tpu.memory_space<vmem>>, vector<16x128xf32>
    %cst_119 = arith.constant dense<0.000000e+00> : vector<8x128xf32>
    %257 = tpu.matmul %255, %256, %cst_119 {dimension_numbers = #tpu.dot_dimension_numbers<[1], [0], [0], [1], [0, 0, 1, 1], [], []>} : vector<8x16xf32>, vector<16x128xf32>, vector<8x128xf32> -> vector<8x128xf32>
    %258 = vector.broadcast %4 : vector<1x128xf32> to vector<8x128xf32>
    %259 = arith.addf %257, %258 : vector<8x128xf32>
    %cst_120 = arith.constant dense<0.000000e+00> : vector<8xf32>
    %260 = vector.multi_reduction <add>, %259, %cst_120 [1] : vector<8x128xf32> to vector<8xf32>
    %261 = vector.shape_cast %260 : vector<8xf32> to vector<8x1xf32>
    %cst_121 = arith.constant 1.280000e+02 : f32
    %262 = vector.broadcast %cst_121 : f32 to vector<8x1xf32>
    %263 = arith.divf %261, %262 : vector<8x1xf32>
    %264 = vector.broadcast %263 : vector<8x1xf32> to vector<8x128xf32>
    %265 = arith.subf %259, %264 : vector<8x128xf32>
    %266 = arith.mulf %265, %265 : vector<8x128xf32>
    %cst_122 = arith.constant dense<0.000000e+00> : vector<8xf32>
    %267 = vector.multi_reduction <add>, %266, %cst_122 [1] : vector<8x128xf32> to vector<8xf32>
    %268 = vector.shape_cast %267 : vector<8xf32> to vector<8x1xf32>
    %cst_123 = arith.constant 1.280000e+02 : f32
    %269 = vector.broadcast %cst_123 : f32 to vector<8x1xf32>
    %270 = arith.divf %268, %269 : vector<8x1xf32>
    %cst_124 = arith.constant 9.99999974E-6 : f32
    %271 = vector.broadcast %cst_124 : f32 to vector<8x1xf32>
    %272 = arith.addf %270, %271 : vector<8x1xf32>
    %273 = math.rsqrt %272 : vector<8x1xf32>
    %274 = vector.broadcast %273 : vector<8x1xf32> to vector<8x128xf32>
    %275 = arith.mulf %265, %274 : vector<8x128xf32>
    %276 = vector.broadcast %2 : vector<1x128xf32> to vector<8x128xf32>
    %277 = arith.mulf %275, %276 : vector<8x128xf32>
    %278 = vector.broadcast %3 : vector<1x128xf32> to vector<8x128xf32>
    %279 = arith.addf %277, %278 : vector<8x128xf32>
    %cst_125 = arith.constant 0.000000e+00 : f32
    %280 = vector.broadcast %cst_125 : f32 to vector<8x128xf32>
    %281 = tpu.concatenate %28, %53, %78, %103, %128, %153, %178, %203, %228, %253, %279, %280 in 0 : vector<1x128xf32>, vector<8x128xf32>, vector<8x128xf32>, vector<8x128xf32>, vector<8x128xf32>, vector<8x128xf32>, vector<8x128xf32>, vector<8x128xf32>, vector<8x128xf32>, vector<8x128xf32>, vector<8x128xf32>, vector<8x128xf32> -> vector<89x128xf32>
    %c0_126 = arith.constant 0 : index
    %c0_127 = arith.constant 0 : index
    %c0_128 = arith.constant 0 : index
    %282 = vector.load %arg4[%c0_126, %c0_127, %c0_128] : memref<1x89x1xf32, #tpu.memory_space<vmem>>, vector<1x89x1xf32>
    %283 = vector.shape_cast %282 : vector<1x89x1xf32> to vector<89x1xf32>
    %284 = vector.broadcast %283 : vector<89x1xf32> to vector<89x128xf32>
    %285 = arith.mulf %281, %284 : vector<89x128xf32>
    %cst_129 = arith.constant 1.000000e+00 : f32
    %286 = vector.broadcast %cst_129 : f32 to vector<89x1xf32>
    %287 = arith.subf %286, %283 : vector<89x1xf32>
    %288 = vector.broadcast %5 : vector<1x128xf32> to vector<89x128xf32>
    %289 = vector.broadcast %287 : vector<89x1xf32> to vector<89x128xf32>
    %290 = arith.mulf %288, %289 : vector<89x128xf32>
    %291 = arith.addf %285, %290 : vector<89x128xf32>
    %c0_130 = arith.constant 0 : index
    %c0_131 = arith.constant 0 : index
    %c0_132 = arith.constant 0 : index
    %292 = vector.load %arg8[%c0_130, %c0_131, %c0_132] : memref<1x89x128xf32, #tpu.memory_space<vmem>>, vector<1x89x128xf32>
    %293 = vector.shape_cast %292 : vector<1x89x128xf32> to vector<89x128xf32>
    %294 = vector.shape_cast %291 : vector<89x128xf32> to vector<1x89x128xf32>
    tpu.vector_store %arg8[%c0_130, %c0_131, %c0_132], %294 {strides = array<i32>} : memref<1x89x128xf32, #tpu.memory_space<vmem>>, vector<1x89x128xf32>,
    return
  }
  func.func @transform_0(%arg0: i32) -> (i32, i32, i32) {
    %c0_i32 = arith.constant 0 : i32
    %c0_i32_0 = arith.constant 0 : i32
    %c0_i32_1 = arith.constant 0 : i32
    return %arg0, %c0_i32, %c0_i32_0 : i32, i32, i32
  }
  func.func @transform_1(%arg0: i32) -> (i32, i32, i32, i32) {
    %c0_i32 = arith.constant 0 : i32
    %c0_i32_0 = arith.constant 0 : i32
    %c0_i32_1 = arith.constant 0 : i32
    %c0_i32_2 = arith.constant 0 : i32
    return %arg0, %c0_i32, %c0_i32_0, %c0_i32_1 : i32, i32, i32, i32
  }
  func.func @transform_2(%arg0: i32) -> (i32, i32, i32) {
    %c0_i32 = arith.constant 0 : i32
    %c0_i32_0 = arith.constant 0 : i32
    %c0_i32_1 = arith.constant 0 : i32
    return %arg0, %c0_i32, %c0_i32_0 : i32, i32, i32
  }
  func.func @transform_3(%arg0: i32) -> (i32, i32, i32) {
    %c0_i32 = arith.constant 0 : i32
    %c0_i32_0 = arith.constant 0 : i32
    %c0_i32_1 = arith.constant 0 : i32
    return %arg0, %c0_i32, %c0_i32_0 : i32, i32, i32
  }
  func.func @transform_4(%arg0: i32) -> (i32, i32) {
    %c0_i32 = arith.constant 0 : i32
    %c0_i32_0 = arith.constant 0 : i32
    %c0_i32_1 = arith.constant 0 : i32
    return %c0_i32, %c0_i32_0 : i32, i32
  }
  func.func @transform_5(%arg0: i32) -> (i32, i32) {
    %c0_i32 = arith.constant 0 : i32
    %c0_i32_0 = arith.constant 0 : i32
    %c0_i32_1 = arith.constant 0 : i32
    return %c0_i32, %c0_i32_0 : i32, i32
  }
  func.func @transform_6(%arg0: i32) -> (i32, i32) {
    %c0_i32 = arith.constant 0 : i32
    %c0_i32_0 = arith.constant 0 : i32
    %c0_i32_1 = arith.constant 0 : i32
    return %c0_i32, %c0_i32_0 : i32, i32
  }
  func.func @transform_7(%arg0: i32) -> (i32, i32, i32) {
    %c0_i32 = arith.constant 0 : i32
    %c0_i32_0 = arith.constant 0 : i32
    %c0_i32_1 = arith.constant 0 : i32
    return %arg0, %c0_i32, %c0_i32_0 : i32, i32, i32
  }
}

</mosaic_0001>

<llo_original>
// kernel: tpu_custom_call.1
$region0: #{tpu_custom_call.1}
  #allocation0 [shape = 'u32[]', space=smem, size = 0x4, offset = 0x4, fixed_abs, tag = 'smem constant byte address 0x4 - core index']
  #allocation1 [shape = 'u32[72,128]{1,0:T(1,128)}', space=vmem, size = 0x9000, scoped, tag = 'internal scratch']
  %s0 = inlined_call_operand.vmem [shape: f32[2,1,128], index: 0, kind: input, shape index: {}]
  %s1 = inlined_call_operand.vmem [shape: f32[2,9,8,128], index: 1, kind: input, shape index: {}]
  %s2 = inlined_call_operand.vmem [shape: f32[2,8,16], index: 2, kind: input, shape index: {}]
  %s3 = inlined_call_operand.vmem [shape: f32[2,89,1], index: 3, kind: input, shape index: {}]
  %s4 = inlined_call_operand.hbm [shape: f32[16,128], index: 4, kind: input, shape index: {}]
  %s5 = inlined_call_operand.vmem [shape: f32[24,128], index: 5, kind: input, shape index: {}]
  %s6 = inlined_call_operand.hbm [shape: f32[16,128], index: 6, kind: input, shape index: {}]
  %s7 = inlined_call_operand.vmem [shape: f32[2,89,128], index: 7, kind: output, shape index: {}]
  %s8 = sld [smem:[#allocation0]]
  $region69: #{tpu_custom_call.1} parent=0
    _
  %s10 = ssub.s32 1, %s8
  %s11 = scalar_select 0, %s10, %s8
  $region1: #{tpu_custom_call.1} parent=0
    #allocation2 [shape = 'u8[8192]{0}', space=vmem, size = 0x2000, scoped, tag = 'input window, operand 4, single buffered']
    #allocation3 [shape = 's32[2]{0}', space=sflag, size = 0x8, scoped, tag = 'scoped memory for tpu_custom_call.1']
    #allocation4 [shape = 'u8[8192]{0}', space=vmem, size = 0x2000, scoped, tag = 'input window, operand 6, single buffered']
    #allocation5 [shape = 's32[1]{0}', space=sflag, size = 0x4, scoped, tag = 'scoped memory for tpu_custom_call.1']
    %12 = vsyncpa [#allocation3], 0
    %13 = vsyncpa [#allocation5], 0
    loop: start=0, step=1, limit=4
    $region2: #{tpu_custom_call.1} parent=1 // loop_pre_header
      _
    $region3: #{tpu_custom_call.1} parent=1 // loop_header
      %s15 = sphi 0, %s19
      %p16 = scmp.ge.s32.totalorder %s15, 4
      %s25 = sphi 0, %s27
      %s28 = sphi 0, %s25
      %s29 = sphi 0, %s28
      %s45 = sphi 0, %s29
      %s51 = sphi 0, %s53
      %s54 = sphi 0, %s51
      %s55 = sphi 0, %s54
      %s71 = sphi 0, %s55
      %s77 = sphi 0, %s79
      %s80 = sphi 0, %s77
      %s81 = sphi 0, %s80
      %s97 = sphi 0, %s81
      %s103 = sphi 0, %s105
      %s106 = sphi 0, %s103
      %s107 = sphi 0, %s106
      %s123 = sphi 0, %s107
      %s127 = sphi 0, %s127
      %s129 = sphi 0, %s127
      %s130 = sphi 0, %s129
      %s144 = sphi 0, %s130
      %s148 = sphi 0, %s148
      %s150 = sphi 0, %s148
      %s151 = sphi 0, %s150
      %s165 = sphi 0, %s151
      %s169 = sphi 0, %s169
      %s171 = sphi 0, %s169
      %s172 = sphi 0, %s171
      %s186 = sphi 0, %s172
      %s192 = sphi 0, %s194
      %s195 = sphi 0, %s192
      %s196 = sphi 0, %s195
      %s212 = sphi 0, %s196
    $region4: #{tpu_custom_call.1} parent=1 // loop_header_branch
      %18 = sbr.rel (%p16) target = $region8
    $region5: #{tpu_custom_call.1} parent=1 // loop_body
      %s20 = ssub.s32 %s15, 1
      %s21 = ssub.s32 %s15, 2
      %s22 = sadd.s32 %s15, 1
      %s23 = ssub.s32 %s15, %s22
      %p24 = scmp.eq.s32.totalorder %s23, 0
      %s26 = sadd.s32 %s25, 1
      %s27 = scalar_select %p24, %s25, %s26
      %p30 = pneg %p24
      %p31 = scmp.eq.s32.totalorder %s15, 1
      %p32 = por %p30, %p31
      %p33 = scmp.ne.s32.totalorder %s25, %s28
      %p34 = scmp.eq.s32.totalorder %s15, 0
      %p35 = por %p33, %p34
      %p36 = scmp.ne.s32.totalorder %s25, %s28
      %p37 = scmp.eq.s32.totalorder %s20, 1
      %p38 = por %p36, %p37
      %p39 = scmp.ne.s32.totalorder %s28, %s29
      %p40 = scmp.eq.s32.totalorder %s20, 0
      %p41 = por %p39, %p40
      %p42 = scmp.ne.s32.totalorder %s28, %s29
      %p43 = scmp.eq.s32.totalorder %s21, 1
      %p44 = por %p42, %p43
      %p46 = scmp.ne.s32.totalorder %s29, %s45
      %p47 = scmp.eq.s32.totalorder %s21, 0
      %p48 = por %p46, %p47
      %s49 = ssub.s32 %s15, %s22
      %p50 = scmp.eq.s32.totalorder %s49, 0
      %s52 = sadd.s32 %s51, 1
      %s53 = scalar_select %p50, %s51, %s52
      %p56 = pneg %p50
      %p57 = scmp.eq.s32.totalorder %s15, 1
      %p58 = por %p56, %p57
      %p59 = scmp.ne.s32.totalorder %s51, %s54
      %p60 = scmp.eq.s32.totalorder %s15, 0
      %p61 = por %p59, %p60
      %p62 = scmp.ne.s32.totalorder %s51, %s54
      %p63 = scmp.eq.s32.totalorder %s20, 1
      %p64 = por %p62, %p63
      %p65 = scmp.ne.s32.totalorder %s54, %s55
      %p66 = scmp.eq.s32.totalorder %s20, 0
      %p67 = por %p65, %p66
      %p68 = scmp.ne.s32.totalorder %s54, %s55
      %p69 = scmp.eq.s32.totalorder %s21, 1
      %p70 = por %p68, %p69
      %p72 = scmp.ne.s32.totalorder %s55, %s71
      %p73 = scmp.eq.s32.totalorder %s21, 0
      %p74 = por %p72, %p73
      %s75 = ssub.s32 %s15, %s22
      %p76 = scmp.eq.s32.totalorder %s75, 0
      %s78 = sadd.s32 %s77, 1
      %s79 = scalar_select %p76, %s77, %s78
      %p82 = pneg %p76
      %p83 = scmp.eq.s32.totalorder %s15, 1
      %p84 = por %p82, %p83
      %p85 = scmp.ne.s32.totalorder %s77, %s80
      %p86 = scmp.eq.s32.totalorder %s15, 0
      %p87 = por %p85, %p86
      %p88 = scmp.ne.s32.totalorder %s77, %s80
      %p89 = scmp.eq.s32.totalorder %s20, 1
      %p90 = por %p88, %p89
      %p91 = scmp.ne.s32.totalorder %s80, %s81
      %p92 = scmp.eq.s32.totalorder %s20, 0
      %p93 = por %p91, %p92
      %p94 = scmp.ne.s32.totalorder %s80, %s81
      %p95 = scmp.eq.s32.totalorder %s21, 1
      %p96 = por %p94, %p95
      %p98 = scmp.ne.s32.totalorder %s81, %s97
      %p99 = scmp.eq.s32.totalorder %s21, 0
      %p100 = por %p98, %p99
      %s101 = ssub.s32 %s15, %s22
      %p102 = scmp.eq.s32.totalorder %s101, 0
      %s104 = sadd.s32 %s103, 1
      %s105 = scalar_select %p102, %s103, %s104
      %p108 = pneg %p102
      %p109 = scmp.eq.s32.totalorder %s15, 1
      %p110 = por %p108, %p109
      %p111 = scmp.ne.s32.totalorder %s103, %s106
      %p112 = scmp.eq.s32.totalorder %s15, 0
      %p113 = por %p111, %p112
      %p114 = scmp.ne.s32.totalorder %s103, %s106
      %p115 = scmp.eq.s32.totalorder %s20, 1
      %p116 = por %p114, %p115
      %p117 = scmp.ne.s32.totalorder %s106, %s107
      %p118 = scmp.eq.s32.totalorder %s20, 0
      %p119 = por %p117, %p118
      %p120 = scmp.ne.s32.totalorder %s106, %s107
      %p121 = scmp.eq.s32.totalorder %s21, 1
      %p122 = por %p120, %p121
      %p124 = scmp.ne.s32.totalorder %s107, %s123
      %p125 = scmp.eq.s32.totalorder %s21, 0
      %p126 = por %p124, %p125
      %s128 = sadd.s32 %s127, 1
      %p131 = scmp.eq.s32.totalorder %s15, 1
      %p132 = scmp.ne.s32.totalorder %s127, %s129
      %p133 = scmp.eq.s32.totalorder %s15, 0
      %p134 = por %p132, %p133
      %p135 = scmp.ne.s32.totalorder %s127, %s129
      %p136 = scmp.eq.s32.totalorder %s20, 1
      %p137 = por %p135, %p136
      %p138 = scmp.ne.s32.totalorder %s129, %s130
      %p139 = scmp.eq.s32.totalorder %s20, 0
      %p140 = por %p138, %p139
      %p141 = scmp.ne.s32.totalorder %s129, %s130
      %p142 = scmp.eq.s32.totalorder %s21, 1
      %p143 = por %p141, %p142
      %p145 = scmp.ne.s32.totalorder %s130, %s144
      %p146 = scmp.eq.s32.totalorder %s21, 0
      %p147 = por %p145, %p146
      %s149 = sadd.s32 %s148, 1
      %p152 = scmp.eq.s32.totalorder %s15, 1
      %p153 = scmp.ne.s32.totalorder %s148, %s150
      %p154 = scmp.eq.s32.totalorder %s15, 0
      %p155 = por %p153, %p154
      %p156 = scmp.ne.s32.totalorder %s148, %s150
      %p157 = scmp.eq.s32.totalorder %s20, 1
      %p158 = por %p156, %p157
      %p159 = scmp.ne.s32.totalorder %s150, %s151
      %p160 = scmp.eq.s32.totalorder %s20, 0
      %p161 = por %p159, %p160
      %p162 = scmp.ne.s32.totalorder %s150, %s151
      %p163 = scmp.eq.s32.totalorder %s21, 1
      %p164 = por %p162, %p163
      %p166 = scmp.ne.s32.totalorder %s151, %s165
      %p167 = scmp.eq.s32.totalorder %s21, 0
      %p168 = por %p166, %p167
      %s170 = sadd.s32 %s169, 1
      %p173 = scmp.eq.s32.totalorder %s15, 1
      %p174 = scmp.ne.s32.totalorder %s169, %s171
      %p175 = scmp.eq.s32.totalorder %s15, 0
      %p176 = por %p174, %p175
      %p177 = scmp.ne.s32.totalorder %s169, %s171
      %p178 = scmp.eq.s32.totalorder %s20, 1
      %p179 = por %p177, %p178
      %p180 = scmp.ne.s32.totalorder %s171, %s172
      %p181 = scmp.eq.s32.totalorder %s20, 0
      %p182 = por %p180, %p181
      %p183 = scmp.ne.s32.totalorder %s171, %s172
      %p184 = scmp.eq.s32.totalorder %s21, 1
      %p185 = por %p183, %p184
      %p187 = scmp.ne.s32.totalorder %s172, %s186
      %p188 = scmp.eq.s32.totalorder %s21, 0
      %p189 = por %p187, %p188
      %s190 = ssub.s32 %s15, %s22
      %p191 = scmp.eq.s32.totalorder %s190, 0
      %s193 = sadd.s32 %s192, 1
      %s194 = scalar_select %p191, %s192, %s193
      %p197 = pneg %p191
      %p198 = scmp.eq.s32.totalorder %s15, 1
      %p199 = por %p197, %p198
      %p200 = scmp.ne.s32.totalorder %s192, %s195
      %p201 = scmp.eq.s32.totalorder %s15, 0
      %p202 = por %p200, %p201
      %p203 = scmp.ne.s32.totalorder %s192, %s195
      %p204 = scmp.eq.s32.totalorder %s20, 1
      %p205 = por %p203, %p204
      %p206 = scmp.ne.s32.totalorder %s195, %s196
      %p207 = scmp.eq.s32.totalorder %s20, 0
      %p208 = por %p206, %p207
      %p209 = scmp.ne.s32.totalorder %s195, %s196
      %p210 = scmp.eq.s32.totalorder %s21, 1
      %p211 = por %p209, %p210
      %p213 = scmp.ne.s32.totalorder %s196, %s212
      %p214 = scmp.eq.s32.totalorder %s21, 0
      %p215 = por %p213, %p214
      %p216 = scmp.le.s32.totalorder 1, %s15
      %p217 = scmp.lt.s32.totalorder %s15, 3
      %p218 = pnand %p216, %p217
      %p219 = pneg %p218
      // Predicated region
      $region9: #{tpu_custom_call.1} parent=5 // pred_check
        _
      $region10: #{tpu_custom_call.1} parent=5 // pred_check_branch
        %221 = sbr.rel (%p218) target = $region12
      $region11: #{tpu_custom_call.1} parent=5 // pred_region
        %s222 = ssub.s32 %s15, 1
        // Predicated region
        $region13: #{tpu_custom_call.1} parent=11 // pred_check
          %p223 = pneg %p140
        $region14: #{tpu_custom_call.1} parent=11 // pred_check_branch
          %225 = sbr.rel (%p223) target = $region16
        $region15: #{tpu_custom_call.1} parent=11 // pred_region
          %227 = vsyncadd [#allocation3], 0
          %s228 = sshll.u32 %s4, 4
          %s229 = int_to_ptr.hbm [resolvable:$true] %s228
          %s230 = sshll.u32 [#allocation2], 4
          %s231 = int_to_ptr.vmem [resolvable:$true] %s230
          %236 = dma.hbm_to_vmem [thread:$0]  %s229, 256, %s231, [#allocation3], 128, 128, 8
        $region16: #{tpu_custom_call.1} parent=11 // pred_fallthru
          _
        // Predicated region
        $region17: #{tpu_custom_call.1} parent=11 // pred_check
          %p237 = pneg %p161
        $region18: #{tpu_custom_call.1} parent=11 // pred_check_branch
          %239 = sbr.rel (%p237) target = $region20
        $region19: #{tpu_custom_call.1} parent=11 // pred_region
          _
        $region20: #{tpu_custom_call.1} parent=11 // pred_fallthru
          _
        // Predicated region
        $region21: #{tpu_custom_call.1} parent=11 // pred_check
          %p240 = pneg %p182
        $region22: #{tpu_custom_call.1} parent=11 // pred_check_branch
          %242 = sbr.rel (%p240) target = $region24
        $region23: #{tpu_custom_call.1} parent=11 // pred_region
          %244 = vsyncadd [#allocation5], 0
          %s245 = sshll.u32 %s6, 4
          %s246 = int_to_ptr.hbm [resolvable:$true] %s245
          %s247 = sshll.u32 [#allocation4], 4
          %s248 = int_to_ptr.vmem [resolvable:$true] %s247
          %253 = dma.hbm_to_vmem [thread:$0]  %s246, 256, %s248, [#allocation5], 128, 128, 8
        $region24: #{tpu_custom_call.1} parent=11 // pred_fallthru
          _
      $region12: #{tpu_custom_call.1} parent=5 // pred_fallthru
        _
      %p254 = scmp.lt.s32.totalorder %s15, 2
      // Predicated region
      $region25: #{tpu_custom_call.1} parent=5 // pred_check
        %p255 = pneg %p254
      $region26: #{tpu_custom_call.1} parent=5 // pred_check_branch
        %257 = sbr.rel (%p255) target = $region28
      $region27: #{tpu_custom_call.1} parent=5 // pred_region
        // Predicated region
        $region29: #{tpu_custom_call.1} parent=27 // pred_check
          %p258 = pneg %p35
        $region30: #{tpu_custom_call.1} parent=27 // pred_check_branch
          %260 = sbr.rel (%p258) target = $region32
        $region31: #{tpu_custom_call.1} parent=27 // pred_region
          %p261 = scmp.lt.s32.totalorder %s15, 1
          %s262 = scalar_select %p261, %s15, 1
          %s263 = scalar_lea.vmem %s0, %s262
        $region32: #{tpu_custom_call.1} parent=27 // pred_fallthru
          _
        // Predicated region
        $region33: #{tpu_custom_call.1} parent=27 // pred_check
          %p264 = pneg %p61
        $region34: #{tpu_custom_call.1} parent=27 // pred_check_branch
          %266 = sbr.rel (%p264) target = $region36
        $region35: #{tpu_custom_call.1} parent=27 // pred_region
          %p267 = scmp.lt.s32.totalorder %s15, 1
          %s268 = scalar_select %p267, %s15, 1
          %s269 = smul.addr %s268, 9
          %s270 = smul.addr %s269, 8
          %s271 = scalar_lea.vmem %s1, %s270
        $region36: #{tpu_custom_call.1} parent=27 // pred_fallthru
          _
        // Predicated region
        $region37: #{tpu_custom_call.1} parent=27 // pred_check
          %p272 = pneg %p87
        $region38: #{tpu_custom_call.1} parent=27 // pred_check_branch
          %274 = sbr.rel (%p272) target = $region40
        $region39: #{tpu_custom_call.1} parent=27 // pred_region
          %p275 = scmp.lt.s32.totalorder %s15, 1
          %s276 = scalar_select %p275, %s15, 1
          %s277 = smul.addr %s276, 8
          %s278 = scalar_lea.vmem %s2, %s277
        $region40: #{tpu_custom_call.1} parent=27 // pred_fallthru
          _
        // Predicated region
        $region41: #{tpu_custom_call.1} parent=27 // pred_check
          %p279 = pneg %p113
        $region42: #{tpu_custom_call.1} parent=27 // pred_check_branch
          %281 = sbr.rel (%p279) target = $region44
        $region43: #{tpu_custom_call.1} parent=27 // pred_region
          %p282 = scmp.lt.s32.totalorder %s15, 1
          %s283 = scalar_select %p282, %s15, 1
          %s284 = smul.addr %s283, 12
          %s285 = smul.addr %s284, 8
          %s286 = scalar_lea.vmem %s3, %s285
        $region44: #{tpu_custom_call.1} parent=27 // pred_fallthru
          _
      $region28: #{tpu_custom_call.1} parent=5 // pred_fallthru
        _
      %p287 = scmp.le.s32.totalorder 1, %s15
      %p288 = scmp.lt.s32.totalorder %s15, 3
      %p289 = pnand %p287, %p288
      %p290 = pneg %p289
      // Predicated region
      $region45: #{tpu_custom_call.1} parent=5 // pred_check
        _
      $region46: #{tpu_custom_call.1} parent=5 // pred_check_branch
        %292 = sbr.rel (%p289) target = $region48
      $region47: #{tpu_custom_call.1} parent=5 // pred_region
        %s293 = ssub.s32 %s15, 1
        // Predicated region
        $region49: #{tpu_custom_call.1} parent=47 // pred_check
          %p294 = pneg %p140
        $region50: #{tpu_custom_call.1} parent=47 // pred_check_branch
          %296 = sbr.rel (%p294) target = $region52
        $region51: #{tpu_custom_call.1} parent=47 // pred_region
          %298 = dma.done [#allocation3], 256
        $region52: #{tpu_custom_call.1} parent=47 // pred_fallthru
          _
        // Predicated region
        $region53: #{tpu_custom_call.1} parent=47 // pred_check
          %p299 = pneg %p182
        $region54: #{tpu_custom_call.1} parent=47 // pred_check_branch
          %301 = sbr.rel (%p299) target = $region56
        $region55: #{tpu_custom_call.1} parent=47 // pred_region
          %303 = dma.done [#allocation5], 256
        $region56: #{tpu_custom_call.1} parent=47 // pred_fallthru
          _
        %p304 = scmp.lt.s32.totalorder %s20, 1
        %s305 = scalar_select %p304, %s20, 1
        %s306 = scalar_lea.vmem %s0, %s305
        %p307 = pneg %p41
        %p308 = pneg %p38
        %p309 = scmp.lt.s32.totalorder %s20, 1
        %s310 = scalar_select %p309, %s20, 1
        %s311 = smul.addr %s310, 9
        %s312 = smul.addr %s311, 8
        %s313 = scalar_lea.vmem %s1, %s312
        %p314 = pneg %p67
        %p315 = pneg %p64
        %p316 = scmp.lt.s32.totalorder %s20, 1
        %s317 = scalar_select %p316, %s20, 1
        %s318 = smul.addr %s317, 8
        %s319 = scalar_lea.vmem %s2, %s318
        %p320 = pneg %p93
        %p321 = pneg %p90
        %p322 = scmp.lt.s32.totalorder %s20, 1
        %s323 = scalar_select %p322, %s20, 1
        %s324 = smul.addr %s323, 12
        %s325 = smul.addr %s324, 8
        %s326 = scalar_lea.vmem %s3, %s325
        %p327 = pneg %p119
        %p328 = pneg %p116
        %p329 = pneg %p140
        %p330 = pneg %p137
        %p331 = pneg %p161
        %p332 = pneg %p158
        %p333 = pneg %p182
        %p334 = pneg %p179
        %p335 = pneg %p208
        %p336 = pneg %p205
        %p337 = scmp.lt.s32.totalorder %s20, 1
        %s338 = scalar_select %p337, %s20, 1
        %s339 = smul.addr %s338, 12
        %s340 = smul.addr %s339, 8
        %s341 = scalar_lea.vmem %s7, %s340
        %p342 = scmp.lt.s32.totalorder %s20, 1
        %s343 = scalar_select %p342, %s20, 1
        %s344 = scalar_lea.vmem %s0, %s343
        %p345 = scmp.lt.s32.totalorder %s20, 1
        %s346 = scalar_select %p345, %s20, 1
        %s347 = smul.addr %s346, 9
        %s348 = smul.addr %s347, 8
        %s349 = scalar_lea.vmem %s1, %s348
        %p350 = scmp.lt.s32.totalorder %s20, 1
        %s351 = scalar_select %p350, %s20, 1
        %s352 = smul.addr %s351, 8
        %s353 = scalar_lea.vmem %s2, %s352
        %p354 = scmp.lt.s32.totalorder %s20, 1
        %s355 = scalar_select %p354, %s20, 1
        %s356 = smul.addr %s355, 12
        %s357 = smul.addr %s356, 8
        %s358 = scalar_lea.vmem %s3, %s357
        %p359 = scmp.lt.s32.totalorder %s20, 1
        %s360 = scalar_select %p359, %s20, 1
        %s361 = smul.addr %s360, 12
        %s362 = smul.addr %s361, 8
        %s363 = scalar_lea.vmem %s7, %s362
        %v364 = vld [vmem:[%s5 + $0x12] sm:$0x1]
        %v365 = vld [vmem:[%s5 + $0x13] sm:$0x1]
        %v366 = vld [vmem:[%s5 + $0x14] sm:$0x1]
        %v367 = vld [vmem:[%s5 + $0x15] sm:$0x1]
        %v368 = vld [vmem:[%s5 + $0x16] sm:$0x1]
        %v369 = vld [vmem:[%s5 + $0x17] sm:$0x1]
        %v370 = vld [vmem:[#allocation2] sm:$0xff]
        %371 = vadd.xlane.f32.xlu0 %v370
        %v372 = vpop.xlane.xlu0 %371
        %v373 = vrcp.pop 128.0
        %v374 = vmul.f32 128.0, %v373
        %v375 = vsub.f32 1.0, %v374
        %v376 = vmul.f32 %v373, %v375
        %v377 = vadd.f32 %v373, %v376
        %vm378 = vweird.f32 %v373
        %v379 = vsel %vm378, %v373, %v377
        %v380 = vmul.f32 %v372, %v379
        %v381 = vsub.f32 %v370, %v380
        %v382 = vmul.f32 %v381, %v381
        %383 = vadd.xlane.f32.xlu0 %v382
        %v384 = vpop.xlane.xlu0 %383
        %v385 = vmul.f32 %v384, %v379
        %v386 = vadd.f32 %v385, 1e-05
        %v387 = vrsqrt.pop %v386
        %v388 = vmul.f32 %v387, %v386
        %v389 = vmul.f32 %v388, %v387
        %v390 = vmul.f32 0.5, %v389
        %v391 = vsub.f32 1.5, %v390
        %v392 = vmul.f32 %v387, %v391
        %vm393 = vweird.f32 %v386
        %vm394 = vweird.f32 %v387
        %vm395 = vmor %vm393, %vm394
        %v396 = vsel %vm395, %v387, %v392
        %v397 = vmul.f32 %v381, %v396
        %v398 = vperm.slane %v364, 0
        %v399 = vmul.f32 %v397, %v398
        %v400 = vperm.slane %v365, 0
        %v401 = vadd.f32 %v399, %v400
        %v402 = vld [vmem:[%s344] sm:$0x1]
        %v403 = vld [vmem:[%s349] sm:$0xff]
        %404 = vadd.xlane.f32.xlu0 %v403
        %v405 = vpop.xlane.xlu0 %404
        %v406 = vmul.f32 %v405, %v379
        %v407 = vsub.f32 %v403, %v406
        %v408 = vmul.f32 %v407, %v407
        %409 = vadd.xlane.f32.xlu0 %v408
        %v410 = vpop.xlane.xlu0 %409
        %v411 = vmul.f32 %v410, %v379
        %v412 = vadd.f32 %v411, 1e-05
        %v413 = vrsqrt.pop %v412
        %v414 = vmul.f32 %v413, %v412
        %v415 = vmul.f32 %v414, %v413
        %v416 = vmul.f32 0.5, %v415
        %v417 = vsub.f32 1.5, %v416
        %v418 = vmul.f32 %v413, %v417
        %vm419 = vweird.f32 %v412
        %vm420 = vweird.f32 %v413
        %vm421 = vmor %vm419, %vm420
        %v422 = vsel %vm421, %v413, %v418
        %v423 = vmul.f32 %v407, %v422
        %v424 = vld [vmem:[%s5] sm:$0x1]
        %v425 = vperm.slane %v424, 0
        %v426 = vmul.f32 %v423, %v425
        %v427 = vld [vmem:[%s5 + $0x9] sm:$0x1]
        %v428 = vperm.slane %v427, 0
        %v429 = vadd.f32 %v426, %v428
        %v430 = vadd.f32 %v429, %v401
        %s431 = scalar_lea.vmem %s349, 8
        %v432 = vld [vmem:[%s431] sm:$0xff]
        %433 = vadd.xlane.f32.xlu0 %v432
        %v434 = vpop.xlane.xlu0 %433
        %v435 = vmul.f32 %v434, %v379
        %v436 = vsub.f32 %v432, %v435
        %v437 = vmul.f32 %v436, %v436
        %438 = vadd.xlane.f32.xlu0 %v437
        %v439 = vpop.xlane.xlu0 %438
        %v440 = vmul.f32 %v439, %v379
        %v441 = vadd.f32 %v440, 1e-05
        %v442 = vrsqrt.pop %v441
        %v443 = vmul.f32 %v442, %v441
        %v444 = vmul.f32 %v443, %v442
        %v445 = vmul.f32 0.5, %v444
        %v446 = vsub.f32 1.5, %v445
        %v447 = vmul.f32 %v442, %v446
        %vm448 = vweird.f32 %v441
        %vm449 = vweird.f32 %v442
        %vm450 = vmor %vm448, %vm449
        %v451 = vsel %vm450, %v442, %v447
        %v452 = vmul.f32 %v436, %v451
        %v453 = vld [vmem:[%s5 + $0x1] sm:$0x1]
        %v454 = vperm.slane %v453, 0
        %v455 = vmul.f32 %v452, %v454
        %v456 = vld [vmem:[%s5 + $0xa] sm:$0x1]
        %v457 = vperm.slane %v456, 0
        %v458 = vadd.f32 %v455, %v457
        %v459 = vadd.f32 %v458, %v401
        %s460 = scalar_lea.vmem %s349, 16
        %v461 = vld [vmem:[%s460] sm:$0xff]
        %462 = vadd.xlane.f32.xlu0 %v461
        %v463 = vpop.xlane.xlu0 %462
        %v464 = vmul.f32 %v463, %v379
        %v465 = vsub.f32 %v461, %v464
        %v466 = vmul.f32 %v465, %v465
        %467 = vadd.xlane.f32.xlu0 %v466
        %v468 = vpop.xlane.xlu0 %467
        %v469 = vmul.f32 %v468, %v379
        %v470 = vadd.f32 %v469, 1e-05
        %v471 = vrsqrt.pop %v470
        %v472 = vmul.f32 %v471, %v470
        %v473 = vmul.f32 %v472, %v471
        %v474 = vmul.f32 0.5, %v473
        %v475 = vsub.f32 1.5, %v474
        %v476 = vmul.f32 %v471, %v475
        %vm477 = vweird.f32 %v470
        %vm478 = vweird.f32 %v471
        %vm479 = vmor %vm477, %vm478
        %v480 = vsel %vm479, %v471, %v476
        %v481 = vmul.f32 %v465, %v480
        %v482 = vld [vmem:[%s5 + $0x2] sm:$0x1]
        %v483 = vperm.slane %v482, 0
        %v484 = vmul.f32 %v481, %v483
        %v485 = vld [vmem:[%s5 + $0xb] sm:$0x1]
        %v486 = vperm.slane %v485, 0
        %v487 = vadd.f32 %v484, %v486
        %v488 = vadd.f32 %v487, %v401
        %s489 = scalar_lea.vmem %s349, 24
        %v490 = vld [vmem:[%s489] sm:$0xff]
        %491 = vadd.xlane.f32.xlu0 %v490
        %v492 = vpop.xlane.xlu0 %491
        %v493 = vmul.f32 %v492, %v379
        %v494 = vsub.f32 %v490, %v493
        %v495 = vmul.f32 %v494, %v494
        %496 = vadd.xlane.f32.xlu0 %v495
        %v497 = vpop.xlane.xlu0 %496
        %v498 = vmul.f32 %v497, %v379
        %v499 = vadd.f32 %v498, 1e-05
        %v500 = vrsqrt.pop %v499
        %v501 = vmul.f32 %v500, %v499
        %v502 = vmul.f32 %v501, %v500
        %v503 = vmul.f32 0.5, %v502
        %v504 = vsub.f32 1.5, %v503
        %v505 = vmul.f32 %v500, %v504
        %vm506 = vweird.f32 %v499
        %vm507 = vweird.f32 %v500
        %vm508 = vmor %vm506, %vm507
        %v509 = vsel %vm508, %v500, %v505
        %v510 = vmul.f32 %v494, %v509
        %v511 = vld [vmem:[%s5 + $0x3] sm:$0x1]
        %v512 = vperm.slane %v511, 0
        %v513 = vmul.f32 %v510, %v512
        %v514 = vld [vmem:[%s5 + $0xc] sm:$0x1]
        %v515 = vperm.slane %v514, 0
        %v516 = vadd.f32 %v513, %v515
        %v517 = vadd.f32 %v516, %v401
        %s518 = scalar_lea.vmem %s349, 32
        %v519 = vld [vmem:[%s518] sm:$0xff]
        %520 = vadd.xlane.f32.xlu0 %v519
        %v521 = vpop.xlane.xlu0 %520
        %v522 = vmul.f32 %v521, %v379
        %v523 = vsub.f32 %v519, %v522
        %v524 = vmul.f32 %v523, %v523
        %525 = vadd.xlane.f32.xlu0 %v524
        %v526 = vpop.xlane.xlu0 %525
        %v527 = vmul.f32 %v526, %v379
        %v528 = vadd.f32 %v527, 1e-05
        %v529 = vrsqrt.pop %v528
        %v530 = vmul.f32 %v529, %v528
        %v531 = vmul.f32 %v530, %v529
        %v532 = vmul.f32 0.5, %v531
        %v533 = vsub.f32 1.5, %v532
        %v534 = vmul.f32 %v529, %v533
        %vm535 = vweird.f32 %v528
        %vm536 = vweird.f32 %v529
        %vm537 = vmor %vm535, %vm536
        %v538 = vsel %vm537, %v529, %v534
        %v539 = vmul.f32 %v523, %v538
        %v540 = vld [vmem:[%s5 + $0x4] sm:$0x1]
        %v541 = vperm.slane %v540, 0
        %v542 = vmul.f32 %v539, %v541
        %v543 = vld [vmem:[%s5 + $0xd] sm:$0x1]
        %v544 = vperm.slane %v543, 0
        %v545 = vadd.f32 %v542, %v544
        %v546 = vadd.f32 %v545, %v401
        %s547 = scalar_lea.vmem %s349, 40
        %v548 = vld [vmem:[%s547] sm:$0xff]
        %549 = vadd.xlane.f32.xlu0 %v548
        %v550 = vpop.xlane.xlu0 %549
        %v551 = vmul.f32 %v550, %v379
        %v552 = vsub.f32 %v548, %v551
        %v553 = vmul.f32 %v552, %v552
        %554 = vadd.xlane.f32.xlu0 %v553
        %v555 = vpop.xlane.xlu0 %554
        %v556 = vmul.f32 %v555, %v379
        %v557 = vadd.f32 %v556, 1e-05
        %v558 = vrsqrt.pop %v557
        %v559 = vmul.f32 %v558, %v557
        %v560 = vmul.f32 %v559, %v558
        %v561 = vmul.f32 0.5, %v560
        %v562 = vsub.f32 1.5, %v561
        %v563 = vmul.f32 %v558, %v562
        %vm564 = vweird.f32 %v557
        %vm565 = vweird.f32 %v558
        %vm566 = vmor %vm564, %vm565
        %v567 = vsel %vm566, %v558, %v563
        %v568 = vmul.f32 %v552, %v567
        %v569 = vld [vmem:[%s5 + $0x5] sm:$0x1]
        %v570 = vperm.slane %v569, 0
        %v571 = vmul.f32 %v568, %v570
        %v572 = vld [vmem:[%s5 + $0xe] sm:$0x1]
        %v573 = vperm.slane %v572, 0
        %v574 = vadd.f32 %v571, %v573
        %v575 = vadd.f32 %v574, %v401
        %s576 = scalar_lea.vmem %s349, 48
        %v577 = vld [vmem:[%s576] sm:$0xff]
        %578 = vadd.xlane.f32.xlu0 %v577
        %v579 = vpop.xlane.xlu0 %578
        %v580 = vmul.f32 %v579, %v379
        %v581 = vsub.f32 %v577, %v580
        %v582 = vmul.f32 %v581, %v581
        %583 = vadd.xlane.f32.xlu0 %v582
        %v584 = vpop.xlane.xlu0 %583
        %v585 = vmul.f32 %v584, %v379
        %v586 = vadd.f32 %v585, 1e-05
        %v587 = vrsqrt.pop %v586
        %v588 = vmul.f32 %v587, %v586
        %v589 = vmul.f32 %v588, %v587
        %v590 = vmul.f32 0.5, %v589
        %v591 = vsub.f32 1.5, %v590
        %v592 = vmul.f32 %v587, %v591
        %vm593 = vweird.f32 %v586
        %vm594 = vweird.f32 %v587
        %vm595 = vmor %vm593, %vm594
        %v596 = vsel %vm595, %v587, %v592
        %v597 = vmul.f32 %v581, %v596
        %v598 = vld [vmem:[%s5 + $0x6] sm:$0x1]
        %v599 = vperm.slane %v598, 0
        %v600 = vmul.f32 %v597, %v599
        %v601 = vld [vmem:[%s5 + $0xf] sm:$0x1]
        %v602 = vperm.slane %v601, 0
        %v603 = vadd.f32 %v600, %v602
        %v604 = vadd.f32 %v603, %v401
        %s605 = scalar_lea.vmem %s349, 56
        %v606 = vld [vmem:[%s605] sm:$0xff]
        %607 = vadd.xlane.f32.xlu0 %v606
        %v608 = vpop.xlane.xlu0 %607
        %v609 = vmul.f32 %v608, %v379
        %v610 = vsub.f32 %v606, %v609
        %v611 = vmul.f32 %v610, %v610
        %612 = vadd.xlane.f32.xlu0 %v611
        %v613 = vpop.xlane.xlu0 %612
        %v614 = vmul.f32 %v613, %v379
        %v615 = vadd.f32 %v614, 1e-05
        %v616 = vrsqrt.pop %v615
        %v617 = vmul.f32 %v616, %v615
        %v618 = vmul.f32 %v617, %v616
        %v619 = vmul.f32 0.5, %v618
        %v620 = vsub.f32 1.5, %v619
        %v621 = vmul.f32 %v616, %v620
        %vm622 = vweird.f32 %v615
        %vm623 = vweird.f32 %v616
        %vm624 = vmor %vm622, %vm623
        %v625 = vsel %vm624, %v616, %v621
        %v626 = vmul.f32 %v610, %v625
        %v627 = vld [vmem:[%s5 + $0x7] sm:$0x1]
        %v628 = vperm.slane %v627, 0
        %v629 = vmul.f32 %v626, %v628
        %v630 = vld [vmem:[%s5 + $0x10] sm:$0x1]
        %v631 = vperm.slane %v630, 0
        %v632 = vadd.f32 %v629, %v631
        %v633 = vadd.f32 %v632, %v401
        %s634 = scalar_lea.vmem %s349, 64
        %v635 = vld [vmem:[%s634] sm:$0xff]
        %636 = vadd.xlane.f32.xlu0 %v635
        %v637 = vpop.xlane.xlu0 %636
        %v638 = vmul.f32 %v637, %v379
        %v639 = vsub.f32 %v635, %v638
        %v640 = vmul.f32 %v639, %v639
        %641 = vadd.xlane.f32.xlu0 %v640
        %v642 = vpop.xlane.xlu0 %641
        %v643 = vmul.f32 %v642, %v379
        %v644 = vadd.f32 %v643, 1e-05
        %v645 = vrsqrt.pop %v644
        %v646 = vmul.f32 %v645, %v644
        %v647 = vmul.f32 %v646, %v645
        %v648 = vmul.f32 0.5, %v647
        %v649 = vsub.f32 1.5, %v648
        %v650 = vmul.f32 %v645, %v649
        %vm651 = vweird.f32 %v644
        %vm652 = vweird.f32 %v645
        %vm653 = vmor %vm651, %vm652
        %v654 = vsel %vm653, %v645, %v650
        %v655 = vmul.f32 %v639, %v654
        %v656 = vld [vmem:[%s5 + $0x8] sm:$0x1]
        %v657 = vperm.slane %v656, 0
        %v658 = vmul.f32 %v655, %v657
        %v659 = vld [vmem:[%s5 + $0x11] sm:$0x1]
        %v660 = vperm.slane %v659, 0
        %v661 = vadd.f32 %v658, %v660
        %v662 = vadd.f32 %v661, %v401
        %v663 = vld [vmem:[%s353] sm:$0xff]
        %v664 = vld [vmem:[#allocation4] sm:$0xff]
        %v665 = vld [vmem:[#allocation4 + $0x8] sm:$0xff]
        %v666 = vperm.slane %v368, 0
        %vm667 = vcmask 130048
        %v669 = vsel %vm667, %v663, 0
        %671 = vmatpush.msra.mxu0 0.0
        %672 = vmatpush.msra.mxu0 0.0
        %673 = vmatpush.msra.mxu0 0.0
        %674 = vmatpush.msra.mxu0 0.0
        %675 = vmatpush.msra.mxu0 0.0
        %676 = vmatpush.msra.mxu0 0.0
        %677 = vmatpush.msra.mxu0 0.0
        %678 = vmatpush.msra.mxu0 0.0
        %679 = vmatpush.msra.mxu0 0.0
        %680 = vmatpush.msra.mxu0 0.0
        %681 = vmatpush.msra.mxu0 0.0
        %682 = vmatpush.msra.mxu0 0.0
        %683 = vmatpush.msra.mxu0 0.0
        %684 = vmatpush.msra.mxu0 0.0
        %685 = vmatpush.msra.mxu0 %v665
        %686 = vmatpush.msra.mxu0 %v664
        %687 = vmatmul.f32.gmra.mxu0 %v669
        %v688 = vpop.f32.mrf.mxu0
        %v689 = vadd.f32 %v666, %v688
        %690 = vdwg.mxu0
        %691 = vadd.xlane.f32.xlu0 %v689
        %v692 = vpop.xlane.xlu0 %691
        %v693 = vmul.f32 %v692, %v379
        %v694 = vsub.f32 %v689, %v693
        %v695 = vmul.f32 %v694, %v694
        %696 = vadd.xlane.f32.xlu0 %v695
        %v697 = vpop.xlane.xlu0 %696
        %v698 = vmul.f32 %v697, %v379
        %v699 = vadd.f32 %v698, 1e-05
        %v700 = vrsqrt.pop %v699
        %v701 = vmul.f32 %v700, %v699
        %v702 = vmul.f32 %v701, %v700
        %v703 = vmul.f32 0.5, %v702
        %v704 = vsub.f32 1.5, %v703
        %v705 = vmul.f32 %v700, %v704
        %vm706 = vweird.f32 %v699
        %vm707 = vweird.f32 %v700
        %vm708 = vmor %vm706, %vm707
        %v709 = vsel %vm708, %v700, %v705
        %v710 = vmul.f32 %v694, %v709
        %v711 = vperm.slane %v366, 0
        %v712 = vmul.f32 %v710, %v711
        %v713 = vperm.slane %v367, 0
        %v714 = vadd.f32 %v712, %v713
        %v716 = vrot.slane %v430, 7
        %v719 = vrot.slane %v459, 7
        %v722 = vrot.slane %v488, 7
        %v725 = vrot.slane %v517, 7
        %v728 = vrot.slane %v546, 7
        %v731 = vrot.slane %v575, 7
        %v734 = vrot.slane %v604, 7
        %v737 = vrot.slane %v633, 7
        %v740 = vrot.slane %v662, 7
        %v743 = vrot.slane %v714, 7
        %vm745 = vcmask 1040384
        %v746 = vsel %vm745, %v402, %v716
        %v747 = vsel %vm745, %v716, %v719
        %v748 = vsel %vm745, %v719, %v722
        %v749 = vsel %vm745, %v722, %v725
        %v750 = vsel %vm745, %v725, %v728
        %v751 = vsel %vm745, %v728, %v731
        %v752 = vsel %vm745, %v731, %v734
        %v753 = vsel %vm745, %v734, %v737
        %v754 = vsel %vm745, %v737, %v740
        %v755 = vsel %vm745, %v740, %v743
        %v756 = vsel %vm745, %v743, 0.0
        %v757 = vld [vmem:[%s358] sm:$0xff]
        %v758 = vld [vmem:[%s358 + $0x8] sm:$0xff]
        %v759 = vld [vmem:[%s358 + $0x10] sm:$0xff]
        %v760 = vld [vmem:[%s358 + $0x18] sm:$0xff]
        %v761 = vld [vmem:[%s358 + $0x20] sm:$0xff]
        %v762 = vld [vmem:[%s358 + $0x28] sm:$0xff]
        %v763 = vld [vmem:[%s358 + $0x30] sm:$0xff]
        %v764 = vld [vmem:[%s358 + $0x38] sm:$0xff]
        %v765 = vld [vmem:[%s358 + $0x40] sm:$0xff]
        %v766 = vld [vmem:[%s358 + $0x48] sm:$0xff]
        %v767 = vld [vmem:[%s358 + $0x50] sm:$0xff]
        %v768 = vld [vmem:[%s358 + $0x58] sm:$0x1]
        %770 = vset.pattern.permute.xlu0 0
        %771 = vperm.xlu0 %770, %v757
        %v772 = vpop.permute.xlu0 %771
        %775 = vset.pattern.permute.xlu0 0
        %776 = vperm.xlu0 %775, %v758
        %v777 = vpop.permute.xlu0 %776
        %780 = vset.pattern.permute.xlu0 0
        %781 = vperm.xlu0 %780, %v759
        %v782 = vpop.permute.xlu0 %781
        %785 = vset.pattern.permute.xlu0 0
        %786 = vperm.xlu0 %785, %v760
        %v787 = vpop.permute.xlu0 %786
        %790 = vset.pattern.permute.xlu0 0
        %791 = vperm.xlu0 %790, %v761
        %v792 = vpop.permute.xlu0 %791
        %795 = vset.pattern.permute.xlu0 0
        %796 = vperm.xlu0 %795, %v762
        %v797 = vpop.permute.xlu0 %796
        %800 = vset.pattern.permute.xlu0 0
        %801 = vperm.xlu0 %800, %v763
        %v802 = vpop.permute.xlu0 %801
        %805 = vset.pattern.permute.xlu0 0
        %806 = vperm.xlu0 %805, %v764
        %v807 = vpop.permute.xlu0 %806
        %810 = vset.pattern.permute.xlu0 0
        %811 = vperm.xlu0 %810, %v765
        %v812 = vpop.permute.xlu0 %811
        %815 = vset.pattern.permute.xlu0 0
        %816 = vperm.xlu0 %815, %v766
        %v817 = vpop.permute.xlu0 %816
        %820 = vset.pattern.permute.xlu0 0
        %821 = vperm.xlu0 %820, %v767
        %v822 = vpop.permute.xlu0 %821
        %825 = vset.pattern.permute.xlu0 0
        %826 = vperm.xlu0 %825, %v768
        %v827 = vpop.permute.xlu0 %826
        %v829 = vmul.f32 %v746, %v772
        %v830 = vmul.f32 %v747, %v777
        %v831 = vmul.f32 %v748, %v782
        %v832 = vmul.f32 %v749, %v787
        %v833 = vmul.f32 %v750, %v792
        %v834 = vmul.f32 %v751, %v797
        %v835 = vmul.f32 %v752, %v802
        %v836 = vmul.f32 %v753, %v807
        %v837 = vmul.f32 %v754, %v812
        %v838 = vmul.f32 %v755, %v817
        %v839 = vmul.f32 %v756, %v822
        %v840 = vmul.f32 %v827, 0.0
        %v841 = vsub.f32 1.0, %v757
        %v842 = vsub.f32 1.0, %v758
        %v843 = vsub.f32 1.0, %v759
        %v844 = vsub.f32 1.0, %v760
        %v845 = vsub.f32 1.0, %v761
        %v846 = vsub.f32 1.0, %v762
        %v847 = vsub.f32 1.0, %v763
        %v848 = vsub.f32 1.0, %v764
        %v849 = vsub.f32 1.0, %v765
        %v850 = vsub.f32 1.0, %v766
        %v851 = vsub.f32 1.0, %v767
        %v852 = vsub.f32 1.0, %v768
        %v853 = vperm.slane %v369, 0
        %855 = vset.pattern.permute.xlu0 0
        %856 = vperm.xlu0 %855, %v841
        %v857 = vpop.permute.xlu0 %856
        %860 = vset.pattern.permute.xlu0 0
        %861 = vperm.xlu0 %860, %v842
        %v862 = vpop.permute.xlu0 %861
        %865 = vset.pattern.permute.xlu0 0
        %866 = vperm.xlu0 %865, %v843
        %v867 = vpop.permute.xlu0 %866
        %870 = vset.pattern.permute.xlu0 0
        %871 = vperm.xlu0 %870, %v844
        %v872 = vpop.permute.xlu0 %871
        %875 = vset.pattern.permute.xlu0 0
        %876 = vperm.xlu0 %875, %v845
        %v877 = vpop.permute.xlu0 %876
        %880 = vset.pattern.permute.xlu0 0
        %881 = vperm.xlu0 %880, %v846
        %v882 = vpop.permute.xlu0 %881
        %885 = vset.pattern.permute.xlu0 0
        %886 = vperm.xlu0 %885, %v847
        %v887 = vpop.permute.xlu0 %886
        %890 = vset.pattern.permute.xlu0 0
        %891 = vperm.xlu0 %890, %v848
        %v892 = vpop.permute.xlu0 %891
        %895 = vset.pattern.permute.xlu0 0
        %896 = vperm.xlu0 %895, %v849
        %v897 = vpop.permute.xlu0 %896
        %900 = vset.pattern.permute.xlu0 0
        %901 = vperm.xlu0 %900, %v850
        %v902 = vpop.permute.xlu0 %901
        %905 = vset.pattern.permute.xlu0 0
        %906 = vperm.xlu0 %905, %v851
        %v907 = vpop.permute.xlu0 %906
        %910 = vset.pattern.permute.xlu0 0
        %911 = vperm.xlu0 %910, %v852
        %v912 = vpop.permute.xlu0 %911
        %v914 = vmul.f32 %v853, %v857
        %v915 = vmul.f32 %v853, %v862
        %v916 = vmul.f32 %v853, %v867
        %v917 = vmul.f32 %v853, %v872
        %v918 = vmul.f32 %v853, %v877
        %v919 = vmul.f32 %v853, %v882
        %v920 = vmul.f32 %v853, %v887
        %v921 = vmul.f32 %v853, %v892
        %v922 = vmul.f32 %v853, %v897
        %v923 = vmul.f32 %v853, %v902
        %v924 = vmul.f32 %v853, %v907
        %v925 = vmul.f32 %v853, %v912
        %v926 = vadd.f32 %v829, %v914
        %v927 = vadd.f32 %v830, %v915
        %v928 = vadd.f32 %v831, %v916
        %v929 = vadd.f32 %v832, %v917
        %v930 = vadd.f32 %v833, %v918
        %v931 = vadd.f32 %v834, %v919
        %v932 = vadd.f32 %v835, %v920
        %v933 = vadd.f32 %v836, %v921
        %v934 = vadd.f32 %v837, %v922
        %v935 = vadd.f32 %v838, %v923
        %v936 = vadd.f32 %v839, %v924
        %v937 = vadd.f32 %v840, %v925
        %938 = vst [vmem:[%s363] sm:$0xff] %v926
        %939 = vst [vmem:[%s363 + $0x8] sm:$0xff] %v927
        %940 = vst [vmem:[%s363 + $0x10] sm:$0xff] %v928
        %941 = vst [vmem:[%s363 + $0x18] sm:$0xff] %v929
        %942 = vst [vmem:[%s363 + $0x20] sm:$0xff] %v930
        %943 = vst [vmem:[%s363 + $0x28] sm:$0xff] %v931
        %944 = vst [vmem:[%s363 + $0x30] sm:$0xff] %v932
        %945 = vst [vmem:[%s363 + $0x38] sm:$0xff] %v933
        %946 = vst [vmem:[%s363 + $0x40] sm:$0xff] %v934
        %947 = vst [vmem:[%s363 + $0x48] sm:$0xff] %v935
        %948 = vst [vmem:[%s363 + $0x50] sm:$0xff] %v936
        %949 = vst [vmem:[%s363 + $0x58] sm:$0x1] %v937
        %p950 = scmp.lt.s32.totalorder %s20, 1
        %s951 = scalar_select %p950, %s20, 1
        %s952 = smul.addr %s951, 12
        %s953 = smul.addr %s952, 8
        %s954 = scalar_lea.vmem %s7, %s953
        // Predicated region
        $region57: #{tpu_custom_call.1} parent=47 // pred_check
          %p955 = pneg %p205
        $region58: #{tpu_custom_call.1} parent=47 // pred_check_branch
          %957 = sbr.rel (%p955) target = $region60
        $region59: #{tpu_custom_call.1} parent=47 // pred_region
          _
        $region60: #{tpu_custom_call.1} parent=47 // pred_fallthru
          _
      $region48: #{tpu_custom_call.1} parent=5 // pred_fallthru
        _
      %p958 = scmp.le.s32.totalorder 2, %s15
      // Predicated region
      $region61: #{tpu_custom_call.1} parent=5 // pred_check
        %p959 = pneg %p958
      $region62: #{tpu_custom_call.1} parent=5 // pred_check_branch
        %961 = sbr.rel (%p959) target = $region64
      $region63: #{tpu_custom_call.1} parent=5 // pred_region
        %s962 = ssub.s32 %s15, 2
        // Predicated region
        $region65: #{tpu_custom_call.1} parent=63 // pred_check
          %p963 = pneg %p211
        $region66: #{tpu_custom_call.1} parent=63 // pred_check_branch
          %965 = sbr.rel (%p963) target = $region68
        $region67: #{tpu_custom_call.1} parent=63 // pred_region
          %p966 = scmp.lt.s32.totalorder %s21, 1
          %s967 = scalar_select %p966, %s21, 1
          %s968 = smul.addr %s967, 12
          %s969 = smul.addr %s968, 8
          %s970 = scalar_lea.vmem %s7, %s969
        $region68: #{tpu_custom_call.1} parent=63 // pred_fallthru
          _
      $region64: #{tpu_custom_call.1} parent=5 // pred_fallthru
        _
    $region6: #{tpu_custom_call.1} parent=1 // loop_footer
      %s19 = sadd.s32 1, %s15
    $region7: #{tpu_custom_call.1} parent=1 // loop_footer_branch
      %14 = sbr.rel target = $region3
    $region8: #{tpu_custom_call.1} parent=1 // loop_exit
      _
    %971 = vsyncpa [#allocation3], 1
    %s972 = scalar_lea.sflag [#allocation3], 1
    %973 = vsyncpa %s972, 1
    %974 = vsyncpa [#allocation5], 1

</llo_original>
